<compile_context>
chip_gen: v7x
topology: tpu7x:2x2x1
jax: 0.10.0
libtpu: 0.0.40
codegen_flags: <defaults>
</compile_context>

<pallas_src>
import math

import jax
import jax.numpy as jnp
from jax.experimental import pallas as pl
from jax.experimental.pallas import tpu as pltpu


def mlp_kernel(x_ref, w1_ref, b1_ref, w2_ref, b2_ref, w3t_ref, b3_ref, o_ref):
    # x_ref: (TB, n_in) ; w1_ref: (n_in, 10) ; b1_ref: (1, 10)  — all f32.
    x = x_ref[...].astype(jnp.float32)          # no-op for f32 inputs
    h1 = jnp.dot(x, w1_ref[...], preferred_element_type=jnp.float32)
    h1 = jnp.maximum(h1 + b1_ref[...], 0.0)

    # (TB, 10) @ (10, 8) + (1, 8), ReLU
    h2 = jnp.dot(h1, w2_ref[...], preferred_element_type=jnp.float32)
    h2 = jnp.maximum(h2 + b2_ref[...], 0.0)

    # Final layer lane-dense: contract w3t (1, 8) with h2 (TB, 8) on the hidden
    # axis -> (1, TB), so the output block has a 128-multiple lane width.
    h3 = jax.lax.dot_general(
        w3t_ref[...], h2,
        dimension_numbers=(((1,), (1,)), ((), ())),
        preferred_element_type=jnp.float32)
    h3 = h3 + b3_ref[...]                        # (1, TB) + (1, 1) broadcast

    # sigmoid(x) == 0.5 * (tanh(x/2) + 1): stable, EUP-friendly.
    o_ref[...] = (0.5 * (jnp.tanh(0.5 * h3) + 1.0)).astype(o_ref.dtype)


def _choose_block_batch(B, block_batch):
    """Pick the per-step batch tile.

    Constraints: the (1, TB) output block needs TB % 128 == 0 (lane-dense,
    unmasked stores) unless TB == B (full-dim exemption), and the (TB, n_in)
    X block needs TB % 8 == 0 unless TB == B.  Prefer >= 2 grid steps so the
    'parallel' batch axis can actually split across v7x's two TensorCores.
    """
    if B <= 256:
        return B                                  # single tile, full-dim exemption
    half = pl.cdiv(B, 2)
    half_aligned = ((half + 127) // 128) * 128    # keep output block lane-dense
    return min(block_batch, half_aligned)


def mlp_forward(x, w1, b1, w2, b2, w3, b3, *, block_batch=65536):
    """x: (B, n_inputs) f32. Weights stored (in, out); returns (B, 1) f32."""
    B, n_in = x.shape
    h1d = w1.shape[1]          # 10
    h2d = w2.shape[1]          # 8

    # Resident (tiny) weights / biases in f32; X streamed in its stored dtype.
    w1f = w1.astype(jnp.float32)
    w2f = w2.astype(jnp.float32)
    w3t = w3.T.astype(jnp.float32)               # (1, 8) — PyTorch (out, in) layout
    b1f = b1.astype(jnp.float32)
    b2f = b2.astype(jnp.float32)
    b3f = b3.astype(jnp.float32)

    tb = _choose_block_batch(B, block_batch)
    grid = (pl.cdiv(B, tb),)

    cost = pl.CostEstimate(
        flops=2 * B * (n_in * h1d + h1d * h2d + h2d * 1),
        transcendentals=B,                        # one tanh per row
        bytes_accessed=(x.size * x.dtype.itemsize + B * 4
                        + (w1f.size + w2f.size + w3t.size) * 4
                        + (b1f.size + b2f.size + b3f.size) * 4),
    )

    out = pl.pallas_call(
        mlp_kernel,
        out_shape=jax.ShapeDtypeStruct((1, B), jnp.float32),
        grid=grid,
        in_specs=[
            pl.BlockSpec((tb, n_in), lambda i: (i, 0)),     # X streamed over batch
            pl.BlockSpec((n_in, h1d), lambda i: (0, 0)),    # weights/biases resident
            pl.BlockSpec((1, h1d), lambda i: (0, 0)),
            pl.BlockSpec((h1d, h2d), lambda i: (0, 0)),
            pl.BlockSpec((1, h2d), lambda i: (0, 0)),
            pl.BlockSpec((1, h2d), lambda i: (0, 0)),       # w3^T (1, 8)
            pl.BlockSpec((1, 1), lambda i: (0, 0)),
        ],
        out_specs=pl.BlockSpec((1, tb), lambda i: (0, i)),  # lane-dense output
        compiler_params=pltpu.CompilerParams(
            dimension_semantics=("parallel",),              # v7x: use both TCs
            vmem_limit_bytes=32 * 1024 * 1024),             # v5e: raise 16 MiB default
        cost_estimate=cost,
    )(x, w1f, b1f, w2f, b2f, w3t, b3f)

    return out.reshape(B, 1)


def init_params(key, n_inputs):
    """Deterministic init mirroring the PyTorch module's init scheme."""
    k1, k2, k3, kb1, kb2, kb3 = jax.random.split(key, 6)

    def kaiming_uniform(k, fan_in, fan_out):
        # kaiming_uniform_ with nonlinearity='relu': gain = sqrt(2)
        bound = math.sqrt(2.0) * math.sqrt(3.0 / fan_in)
        # stored as (in, out) == transpose of PyTorch's (out, in)
        return jax.random.uniform(k, (fan_in, fan_out), jnp.float32, -bound, bound)

    def xavier_uniform(k, fan_in, fan_out):
        bound = math.sqrt(6.0 / (fan_in + fan_out))
        return jax.random.uniform(k, (fan_in, fan_out), jnp.float32, -bound, bound)

    def linear_bias(k, fan_in, fan_out):
        # default nn.Linear bias init: U(-1/sqrt(fan_in), 1/sqrt(fan_in))
        bound = 1.0 / math.sqrt(fan_in)
        return jax.random.uniform(k, (1, fan_out), jnp.float32, -bound, bound)

    w1 = kaiming_uniform(k1, n_inputs, 10)
    b1 = linear_bias(kb1, n_inputs, 10)
    w2 = kaiming_uniform(k2, 10, 8)
    b2 = linear_bias(kb2, 10, 8)
    w3 = xavier_uniform(k3, 8, 1)
    b3 = linear_bias(kb3, 8, 1)
    return w1, b1, w2, b2, w3, b3


if __name__ == "__main__":
    key = jax.random.PRNGKey(0)
    kx, kp = jax.random.split(key)

    n_inputs = 32
    params = init_params(kp, n_inputs)
    w1, b1, w2, b2, w3, b3 = params

    def reference(x):
        # Pure f32 reference matching the PyTorch module's forward.
        h = jnp.maximum(jnp.dot(x, w1) + b1, 0.0)
        h = jnp.maximum(jnp.dot(h, w2) + b2, 0.0)
        return jax.nn.sigmoid(jnp.dot(h, w3) + b3)

    # Multi-tile case: exercises the batch grid / software pipelining (grid=2,
    # tb=512 — the tile chooser keeps >=2 steps at small B).
    batch = 1024
    x = jax.random.normal(kx, (batch, n_inputs), jnp.float32)
    out = mlp_forward(x, *params)
    jax.block_until_ready(out)
    assert out.shape == (batch, 1)
    # Tolerance covers both exact-f32 and multi-pass MXU precision regimes.
    assert jnp.allclose(out, reference(x), atol=1e-2, rtol=1e-2), \
        "mismatch vs f32 reference (tiled)"

    # Tiny-batch case: single (full-dim) block path.
    x_small = jax.random.normal(kx, (8, n_inputs), jnp.float32)
    out_small = mlp_forward(x_small, *params)
    jax.block_until_ready(out_small)
    assert out_small.shape == (8, 1)
    assert jnp.allclose(out_small, reference(x_small), atol=1e-2, rtol=1e-2), \
        "mismatch vs f32 reference (small)"

    print("KERNEL_OK")
</pallas_src>

<mosaic_0001>
module attributes {stable_mosaic.version = 11 : i64} {
  func.func @mlp_kernel(%arg0: i32, %arg1: memref<512x32xf32, #tpu.memory_space<vmem>>, %arg2: memref<32x10xf32, #tpu.memory_space<vmem>>, %arg3: memref<1x10xf32, #tpu.memory_space<vmem>>, %arg4: memref<10x8xf32, #tpu.memory_space<vmem>>, %arg5: memref<1x8xf32, #tpu.memory_space<vmem>>, %arg6: memref<1x8xf32, #tpu.memory_space<vmem>>, %arg7: memref<1x1xf32, #tpu.memory_space<vmem>>, %arg8: memref<1x512xf32, #tpu.memory_space<vmem>>) attributes {dimension_semantics = [#tpu.dimension_semantics<parallel>], iteration_bounds = array<i64: 2>, scalar_prefetch = 0 : i64, scratch_operands = 0 : i64, tpu.core_type = #tpu.core_type<tc>, window_params = [{transform_indices = @transform_0, window_bounds = array<i64: 512, 32>}, {pipeline_mode = #tpu.pipeline_mode<synchronous>, transform_indices = @transform_1, window_bounds = array<i64: 32, 10>}, {pipeline_mode = #tpu.pipeline_mode<synchronous>, transform_indices = @transform_2, window_bounds = array<i64: 1, 10>}, {pipeline_mode = #tpu.pipeline_mode<synchronous>, transform_indices = @transform_3, window_bounds = array<i64: 10, 8>}, {pipeline_mode = #tpu.pipeline_mode<synchronous>, transform_indices = @transform_4, window_bounds = array<i64: 1, 8>}, {pipeline_mode = #tpu.pipeline_mode<synchronous>, transform_indices = @transform_5, window_bounds = array<i64: 1, 8>}, {pipeline_mode = #tpu.pipeline_mode<synchronous>, transform_indices = @transform_6, window_bounds = array<i64: 1, 1>}, {transform_indices = @transform_7, window_bounds = array<i64: 1, 512>}]} {
    %c0 = arith.constant 0 : index
    %c0_0 = arith.constant 0 : index
    %0 = vector.load %arg1[%c0, %c0_0] : memref<512x32xf32, #tpu.memory_space<vmem>>, vector<512x32xf32>
    %c0_1 = arith.constant 0 : index
    %c0_2 = arith.constant 0 : index
    %1 = vector.load %arg2[%c0_1, %c0_2] : memref<32x10xf32, #tpu.memory_space<vmem>>, vector<32x10xf32>
    %cst = arith.constant dense<0.000000e+00> : vector<512x10xf32>
    %2 = tpu.matmul %0, %1, %cst {dimension_numbers = #tpu.dot_dimension_numbers<[1], [0], [0], [1], [0, 0, 1, 1], [], []>} : vector<512x32xf32>, vector<32x10xf32>, vector<512x10xf32> -> vector<512x10xf32>
    %c0_3 = arith.constant 0 : index
    %c0_4 = arith.constant 0 : index
    %3 = vector.load %arg3[%c0_3, %c0_4] : memref<1x10xf32, #tpu.memory_space<vmem>>, vector<1x10xf32>
    %4 = vector.broadcast %3 : vector<1x10xf32> to vector<512x10xf32>
    %5 = arith.addf %2, %4 : vector<512x10xf32>
    %cst_5 = arith.constant 0.000000e+00 : f32
    %6 = vector.broadcast %cst_5 : f32 to vector<512x10xf32>
    %7 = arith.maximumf %5, %6 : vector<512x10xf32>
    %c0_6 = arith.constant 0 : index
    %c0_7 = arith.constant 0 : index
    %8 = vector.load %arg4[%c0_6, %c0_7] : memref<10x8xf32, #tpu.memory_space<vmem>>, vector<10x8xf32>
    %cst_8 = arith.constant dense<0.000000e+00> : vector<512x8xf32>
    %9 = tpu.matmul %7, %8, %cst_8 {dimension_numbers = #tpu.dot_dimension_numbers<[1], [0], [0], [1], [0, 0, 1, 1], [], []>} : vector<512x10xf32>, vector<10x8xf32>, vector<512x8xf32> -> vector<512x8xf32>
    %c0_9 = arith.constant 0 : index
    %c0_10 = arith.constant 0 : index
    %10 = vector.load %arg5[%c0_9, %c0_10] : memref<1x8xf32, #tpu.memory_space<vmem>>, vector<1x8xf32>
    %11 = vector.broadcast %10 : vector<1x8xf32> to vector<512x8xf32>
    %12 = arith.addf %9, %11 : vector<512x8xf32>
    %cst_11 = arith.constant 0.000000e+00 : f32
    %13 = vector.broadcast %cst_11 : f32 to vector<512x8xf32>
    %14 = arith.maximumf %12, %13 : vector<512x8xf32>
    %c0_12 = arith.constant 0 : index
    %c0_13 = arith.constant 0 : index
    %15 = vector.load %arg6[%c0_12, %c0_13] : memref<1x8xf32, #tpu.memory_space<vmem>>, vector<1x8xf32>
    %cst_14 = arith.constant dense<0.000000e+00> : vector<1x512xf32>
    %16 = tpu.matmul %15, %14, %cst_14 {dimension_numbers = #tpu.dot_dimension_numbers<[1], [1], [0], [0], [0, 0, 1, 0], [], []>} : vector<1x8xf32>, vector<512x8xf32>, vector<1x512xf32> -> vector<1x512xf32>
    %c0_15 = arith.constant 0 : index
    %c0_16 = arith.constant 0 : index
    %17 = vector.load %arg7[%c0_15, %c0_16] : memref<1x1xf32, #tpu.memory_space<vmem>>, vector<1x1xf32>
    %18 = vector.broadcast %17 : vector<1x1xf32> to vector<1x512xf32>
    %19 = arith.addf %16, %18 : vector<1x512xf32>
    %cst_17 = arith.constant 5.000000e-01 : f32
    %20 = vector.broadcast %cst_17 : f32 to vector<1x512xf32>
    %21 = arith.mulf %20, %19 : vector<1x512xf32>
    %22 = math.tanh %21 : vector<1x512xf32>
    %cst_18 = arith.constant 1.000000e+00 : f32
    %23 = vector.broadcast %cst_18 : f32 to vector<1x512xf32>
    %24 = arith.addf %22, %23 : vector<1x512xf32>
    %cst_19 = arith.constant 5.000000e-01 : f32
    %25 = vector.broadcast %cst_19 : f32 to vector<1x512xf32>
    %26 = arith.mulf %25, %24 : vector<1x512xf32>
    %c0_20 = arith.constant 0 : index
    %c0_21 = arith.constant 0 : index
    %27 = vector.load %arg8[%c0_20, %c0_21] : memref<1x512xf32, #tpu.memory_space<vmem>>, vector<1x512xf32>
    tpu.vector_store %arg8[%c0_20, %c0_21], %26 {strides = array<i32>} : memref<1x512xf32, #tpu.memory_space<vmem>>, vector<1x512xf32>,
    return
  }
  func.func @transform_0(%arg0: i32) -> (i32, i32) {
    %c0_i32 = arith.constant 0 : i32
    %c0_i32_0 = arith.constant 0 : i32
    return %arg0, %c0_i32 : i32, i32
  }
  func.func @transform_1(%arg0: i32) -> (i32, i32) {
    %c0_i32 = arith.constant 0 : i32
    %c0_i32_0 = arith.constant 0 : i32
    %c0_i32_1 = arith.constant 0 : i32
    return %c0_i32, %c0_i32_0 : i32, i32
  }
  func.func @transform_2(%arg0: i32) -> (i32, i32) {
    %c0_i32 = arith.constant 0 : i32
    %c0_i32_0 = arith.constant 0 : i32
    %c0_i32_1 = arith.constant 0 : i32
    return %c0_i32, %c0_i32_0 : i32, i32
  }
  func.func @transform_3(%arg0: i32) -> (i32, i32) {
    %c0_i32 = arith.constant 0 : i32
    %c0_i32_0 = arith.constant 0 : i32
    %c0_i32_1 = arith.constant 0 : i32
    return %c0_i32, %c0_i32_0 : i32, i32
  }
  func.func @transform_4(%arg0: i32) -> (i32, i32) {
    %c0_i32 = arith.constant 0 : i32
    %c0_i32_0 = arith.constant 0 : i32
    %c0_i32_1 = arith.constant 0 : i32
    return %c0_i32, %c0_i32_0 : i32, i32
  }
  func.func @transform_5(%arg0: i32) -> (i32, i32) {
    %c0_i32 = arith.constant 0 : i32
    %c0_i32_0 = arith.constant 0 : i32
    %c0_i32_1 = arith.constant 0 : i32
    return %c0_i32, %c0_i32_0 : i32, i32
  }
  func.func @transform_6(%arg0: i32) -> (i32, i32) {
    %c0_i32 = arith.constant 0 : i32
    %c0_i32_0 = arith.constant 0 : i32
    %c0_i32_1 = arith.constant 0 : i32
    return %c0_i32, %c0_i32_0 : i32, i32
  }
  func.func @transform_7(%arg0: i32) -> (i32, i32) {
    %c0_i32 = arith.constant 0 : i32
    %c0_i32_0 = arith.constant 0 : i32
    return %c0_i32, %arg0 : i32, i32
  }
}

</mosaic_0001>

<llo_original>
// kernel: tpu_custom_call.1
$region0: #{tpu_custom_call.1}
  #allocation0 [shape = 'u32[]', space=smem, size = 0x4, offset = 0x4, fixed_abs, tag = 'smem constant byte address 0x4 - core index']
  #allocation1 [shape = 'u32[144,128]{1,0:T(1,128)}', space=vmem, size = 0x12000, scoped, tag = 'internal scratch']
  #allocation2 [shape = 'f32[1,1]{1,0:T(1,128)S(1)}', space=vmem, size = 0x200, scoped, tag = 'scoped memory for tpu_custom_call.1']
  %s0 = inlined_call_operand.vmem [shape: f32[1024,32], index: 0, kind: input, shape index: {}]
  %s1 = inlined_call_operand.vmem [shape: f32[32,10], index: 1, kind: input, shape index: {}]
  %s2 = inlined_call_operand.vmem [shape: f32[1,10], index: 2, kind: input, shape index: {}]
  %s3 = inlined_call_operand.vmem [shape: f32[10,8], index: 3, kind: input, shape index: {}]
  %s4 = inlined_call_operand.vmem [shape: f32[1,8], index: 4, kind: input, shape index: {}]
  %s5 = inlined_call_operand.vmem [shape: f32[1,8], index: 5, kind: input, shape index: {}]
  %s6 = inlined_call_operand.<no memory space> [shape: f32[1,1], index: 6, kind: input, shape index: {}]
  %s7 = inlined_call_operand.hbm [shape: f32[1,1024], index: 7, kind: output, shape index: {}]
  %s8 = sld [smem:[#allocation0]]
  $region61: #{tpu_custom_call.1} parent=0
    _
  %s10 = ssub.s32 1, %s8
  %s11 = scalar_select 0, %s10, %s8
  %v12 = vstv %s6
  %13 = vst [vmem:[#allocation2] sm:$0x1] %v12
  $region1: #{tpu_custom_call.1} parent=0
    #allocation3 [shape = 'u8[4096]{0}', space=vmem, size = 0x1000, scoped, tag = 'output window, operand 0']
    #allocation4 [shape = 's32[2]{0}', space=sflag, size = 0x8, scoped, tag = 'scoped memory for tpu_custom_call.1']
    %14 = vsyncpa [#allocation4], 0
    %s15 = scalar_lea.sflag [#allocation4], 1
    %16 = vsyncpa %s15, 0
    loop: start=0, step=1, limit=4
    $region2: #{tpu_custom_call.1} parent=1 // loop_pre_header
      _
    $region3: #{tpu_custom_call.1} parent=1 // loop_header
      %s18 = sphi 0, %s22
      %p19 = scmp.ge.s32.totalorder %s18, 4
      %s28 = sphi 0, %s30
      %s31 = sphi 0, %s28
      %s32 = sphi 0, %s31
      %s48 = sphi 0, %s32
      %s52 = sphi 0, %s52
      %s54 = sphi 0, %s52
      %s55 = sphi 0, %s54
      %s69 = sphi 0, %s55
      %s73 = sphi 0, %s73
      %s75 = sphi 0, %s73
      %s76 = sphi 0, %s75
      %s90 = sphi 0, %s76
      %s94 = sphi 0, %s94
      %s96 = sphi 0, %s94
      %s97 = sphi 0, %s96
      %s111 = sphi 0, %s97
      %s115 = sphi 0, %s115
      %s117 = sphi 0, %s115
      %s118 = sphi 0, %s117
      %s132 = sphi 0, %s118
      %s136 = sphi 0, %s136
      %s138 = sphi 0, %s136
      %s139 = sphi 0, %s138
      %s153 = sphi 0, %s139
      %s157 = sphi 0, %s157
      %s159 = sphi 0, %s157
      %s160 = sphi 0, %s159
      %s174 = sphi 0, %s160
      %s180 = sphi 0, %s182
      %s183 = sphi 0, %s180
      %s184 = sphi 0, %s183
      %s200 = sphi 0, %s184
    $region4: #{tpu_custom_call.1} parent=1 // loop_header_branch
      %21 = sbr.rel (%p19) target = $region8
    $region5: #{tpu_custom_call.1} parent=1 // loop_body
      %s23 = ssub.s32 %s18, 1
      %s24 = ssub.s32 %s18, 2
      %s25 = sadd.s32 %s18, 1
      %s26 = ssub.s32 %s18, %s25
      %p27 = scmp.eq.s32.totalorder %s26, 0
      %s29 = sadd.s32 %s28, 1
      %s30 = scalar_select %p27, %s28, %s29
      %p33 = pneg %p27
      %p34 = scmp.eq.s32.totalorder %s18, 1
      %p35 = por %p33, %p34
      %p36 = scmp.ne.s32.totalorder %s28, %s31
      %p37 = scmp.eq.s32.totalorder %s18, 0
      %p38 = por %p36, %p37
      %p39 = scmp.ne.s32.totalorder %s28, %s31
      %p40 = scmp.eq.s32.totalorder %s23, 1
      %p41 = por %p39, %p40
      %p42 = scmp.ne.s32.totalorder %s31, %s32
      %p43 = scmp.eq.s32.totalorder %s23, 0
      %p44 = por %p42, %p43
      %p45 = scmp.ne.s32.totalorder %s31, %s32
      %p46 = scmp.eq.s32.totalorder %s24, 1
      %p47 = por %p45, %p46
      %p49 = scmp.ne.s32.totalorder %s32, %s48
      %p50 = scmp.eq.s32.totalorder %s24, 0
      %p51 = por %p49, %p50
      %s53 = sadd.s32 %s52, 1
      %p56 = scmp.eq.s32.totalorder %s18, 1
      %p57 = scmp.ne.s32.totalorder %s52, %s54
      %p58 = scmp.eq.s32.totalorder %s18, 0
      %p59 = por %p57, %p58
      %p60 = scmp.ne.s32.totalorder %s52, %s54
      %p61 = scmp.eq.s32.totalorder %s23, 1
      %p62 = por %p60, %p61
      %p63 = scmp.ne.s32.totalorder %s54, %s55
      %p64 = scmp.eq.s32.totalorder %s23, 0
      %p65 = por %p63, %p64
      %p66 = scmp.ne.s32.totalorder %s54, %s55
      %p67 = scmp.eq.s32.totalorder %s24, 1
      %p68 = por %p66, %p67
      %p70 = scmp.ne.s32.totalorder %s55, %s69
      %p71 = scmp.eq.s32.totalorder %s24, 0
      %p72 = por %p70, %p71
      %s74 = sadd.s32 %s73, 1
      %p77 = scmp.eq.s32.totalorder %s18, 1
      %p78 = scmp.ne.s32.totalorder %s73, %s75
      %p79 = scmp.eq.s32.totalorder %s18, 0
      %p80 = por %p78, %p79
      %p81 = scmp.ne.s32.totalorder %s73, %s75
      %p82 = scmp.eq.s32.totalorder %s23, 1
      %p83 = por %p81, %p82
      %p84 = scmp.ne.s32.totalorder %s75, %s76
      %p85 = scmp.eq.s32.totalorder %s23, 0
      %p86 = por %p84, %p85
      %p87 = scmp.ne.s32.totalorder %s75, %s76
      %p88 = scmp.eq.s32.totalorder %s24, 1
      %p89 = por %p87, %p88
      %p91 = scmp.ne.s32.totalorder %s76, %s90
      %p92 = scmp.eq.s32.totalorder %s24, 0
      %p93 = por %p91, %p92
      %s95 = sadd.s32 %s94, 1
      %p98 = scmp.eq.s32.totalorder %s18, 1
      %p99 = scmp.ne.s32.totalorder %s94, %s96
      %p100 = scmp.eq.s32.totalorder %s18, 0
      %p101 = por %p99, %p100
      %p102 = scmp.ne.s32.totalorder %s94, %s96
      %p103 = scmp.eq.s32.totalorder %s23, 1
      %p104 = por %p102, %p103
      %p105 = scmp.ne.s32.totalorder %s96, %s97
      %p106 = scmp.eq.s32.totalorder %s23, 0
      %p107 = por %p105, %p106
      %p108 = scmp.ne.s32.totalorder %s96, %s97
      %p109 = scmp.eq.s32.totalorder %s24, 1
      %p110 = por %p108, %p109
      %p112 = scmp.ne.s32.totalorder %s97, %s111
      %p113 = scmp.eq.s32.totalorder %s24, 0
      %p114 = por %p112, %p113
      %s116 = sadd.s32 %s115, 1
      %p119 = scmp.eq.s32.totalorder %s18, 1
      %p120 = scmp.ne.s32.totalorder %s115, %s117
      %p121 = scmp.eq.s32.totalorder %s18, 0
      %p122 = por %p120, %p121
      %p123 = scmp.ne.s32.totalorder %s115, %s117
      %p124 = scmp.eq.s32.totalorder %s23, 1
      %p125 = por %p123, %p124
      %p126 = scmp.ne.s32.totalorder %s117, %s118
      %p127 = scmp.eq.s32.totalorder %s23, 0
      %p128 = por %p126, %p127
      %p129 = scmp.ne.s32.totalorder %s117, %s118
      %p130 = scmp.eq.s32.totalorder %s24, 1
      %p131 = por %p129, %p130
      %p133 = scmp.ne.s32.totalorder %s118, %s132
      %p134 = scmp.eq.s32.totalorder %s24, 0
      %p135 = por %p133, %p134
      %s137 = sadd.s32 %s136, 1
      %p140 = scmp.eq.s32.totalorder %s18, 1
      %p141 = scmp.ne.s32.totalorder %s136, %s138
      %p142 = scmp.eq.s32.totalorder %s18, 0
      %p143 = por %p141, %p142
      %p144 = scmp.ne.s32.totalorder %s136, %s138
      %p145 = scmp.eq.s32.totalorder %s23, 1
      %p146 = por %p144, %p145
      %p147 = scmp.ne.s32.totalorder %s138, %s139
      %p148 = scmp.eq.s32.totalorder %s23, 0
      %p149 = por %p147, %p148
      %p150 = scmp.ne.s32.totalorder %s138, %s139
      %p151 = scmp.eq.s32.totalorder %s24, 1
      %p152 = por %p150, %p151
      %p154 = scmp.ne.s32.totalorder %s139, %s153
      %p155 = scmp.eq.s32.totalorder %s24, 0
      %p156 = por %p154, %p155
      %s158 = sadd.s32 %s157, 1
      %p161 = scmp.eq.s32.totalorder %s18, 1
      %p162 = scmp.ne.s32.totalorder %s157, %s159
      %p163 = scmp.eq.s32.totalorder %s18, 0
      %p164 = por %p162, %p163
      %p165 = scmp.ne.s32.totalorder %s157, %s159
      %p166 = scmp.eq.s32.totalorder %s23, 1
      %p167 = por %p165, %p166
      %p168 = scmp.ne.s32.totalorder %s159, %s160
      %p169 = scmp.eq.s32.totalorder %s23, 0
      %p170 = por %p168, %p169
      %p171 = scmp.ne.s32.totalorder %s159, %s160
      %p172 = scmp.eq.s32.totalorder %s24, 1
      %p173 = por %p171, %p172
      %p175 = scmp.ne.s32.totalorder %s160, %s174
      %p176 = scmp.eq.s32.totalorder %s24, 0
      %p177 = por %p175, %p176
      %s178 = ssub.s32 %s18, %s25
      %p179 = scmp.eq.s32.totalorder %s178, 0
      %s181 = sadd.s32 %s180, 1
      %s182 = scalar_select %p179, %s180, %s181
      %p185 = pneg %p179
      %p186 = scmp.eq.s32.totalorder %s18, 1
      %p187 = por %p185, %p186
      %p188 = scmp.ne.s32.totalorder %s180, %s183
      %p189 = scmp.eq.s32.totalorder %s18, 0
      %p190 = por %p188, %p189
      %p191 = scmp.ne.s32.totalorder %s180, %s183
      %p192 = scmp.eq.s32.totalorder %s23, 1
      %p193 = por %p191, %p192
      %p194 = scmp.ne.s32.totalorder %s183, %s184
      %p195 = scmp.eq.s32.totalorder %s23, 0
      %p196 = por %p194, %p195
      %p197 = scmp.ne.s32.totalorder %s183, %s184
      %p198 = scmp.eq.s32.totalorder %s24, 1
      %p199 = por %p197, %p198
      %p201 = scmp.ne.s32.totalorder %s184, %s200
      %p202 = scmp.eq.s32.totalorder %s24, 0
      %p203 = por %p201, %p202
      %p204 = scmp.le.s32.totalorder 1, %s18
      %p205 = scmp.lt.s32.totalorder %s18, 3
      %p206 = pnand %p204, %p205
      %p207 = pneg %p206
      // Predicated region
      $region9: #{tpu_custom_call.1} parent=5 // pred_check
        _
      $region10: #{tpu_custom_call.1} parent=5 // pred_check_branch
        %209 = sbr.rel (%p206) target = $region12
      $region11: #{tpu_custom_call.1} parent=5 // pred_region
        %s210 = ssub.s32 %s18, 1
        // Predicated region
        $region13: #{tpu_custom_call.1} parent=11 // pred_check
          %p211 = pneg %p65
        $region14: #{tpu_custom_call.1} parent=11 // pred_check_branch
          %213 = sbr.rel (%p211) target = $region16
        $region15: #{tpu_custom_call.1} parent=11 // pred_region
          _
        $region16: #{tpu_custom_call.1} parent=11 // pred_fallthru
          _
        // Predicated region
        $region17: #{tpu_custom_call.1} parent=11 // pred_check
          %p214 = pneg %p86
        $region18: #{tpu_custom_call.1} parent=11 // pred_check_branch
          %216 = sbr.rel (%p214) target = $region20
        $region19: #{tpu_custom_call.1} parent=11 // pred_region
          _
        $region20: #{tpu_custom_call.1} parent=11 // pred_fallthru
          _
        // Predicated region
        $region21: #{tpu_custom_call.1} parent=11 // pred_check
          %p217 = pneg %p107
        $region22: #{tpu_custom_call.1} parent=11 // pred_check_branch
          %219 = sbr.rel (%p217) target = $region24
        $region23: #{tpu_custom_call.1} parent=11 // pred_region
          _
        $region24: #{tpu_custom_call.1} parent=11 // pred_fallthru
          _
        // Predicated region
        $region25: #{tpu_custom_call.1} parent=11 // pred_check
          %p220 = pneg %p128
        $region26: #{tpu_custom_call.1} parent=11 // pred_check_branch
          %222 = sbr.rel (%p220) target = $region28
        $region27: #{tpu_custom_call.1} parent=11 // pred_region
          _
        $region28: #{tpu_custom_call.1} parent=11 // pred_fallthru
          _
        // Predicated region
        $region29: #{tpu_custom_call.1} parent=11 // pred_check
          %p223 = pneg %p149
        $region30: #{tpu_custom_call.1} parent=11 // pred_check_branch
          %225 = sbr.rel (%p223) target = $region32
        $region31: #{tpu_custom_call.1} parent=11 // pred_region
          _
        $region32: #{tpu_custom_call.1} parent=11 // pred_fallthru
          _
        // Predicated region
        $region33: #{tpu_custom_call.1} parent=11 // pred_check
          %p226 = pneg %p170
        $region34: #{tpu_custom_call.1} parent=11 // pred_check_branch
          %228 = sbr.rel (%p226) target = $region36
        $region35: #{tpu_custom_call.1} parent=11 // pred_region
          _
        $region36: #{tpu_custom_call.1} parent=11 // pred_fallthru
          _
      $region12: #{tpu_custom_call.1} parent=5 // pred_fallthru
        _
      %p229 = scmp.lt.s32.totalorder %s18, 2
      // Predicated region
      $region37: #{tpu_custom_call.1} parent=5 // pred_check
        %p230 = pneg %p229
      $region38: #{tpu_custom_call.1} parent=5 // pred_check_branch
        %232 = sbr.rel (%p230) target = $region40
      $region39: #{tpu_custom_call.1} parent=5 // pred_region
        // Predicated region
        $region41: #{tpu_custom_call.1} parent=39 // pred_check
          %p233 = pneg %p38
        $region42: #{tpu_custom_call.1} parent=39 // pred_check_branch
          %235 = sbr.rel (%p233) target = $region44
        $region43: #{tpu_custom_call.1} parent=39 // pred_region
          %s236 = smul.u32 64, %s18
          %p237 = scmp.lt.s32.totalorder %s236, 127
          %s238 = scalar_select %p237, %s236, 127
          %s239 = smul.addr %s238, 8
          %s240 = scalar_lea.vmem %s0, %s239
          %s241 = smul.u32 64, %s18
        $region44: #{tpu_custom_call.1} parent=39 // pred_fallthru
          _
      $region40: #{tpu_custom_call.1} parent=5 // pred_fallthru
        _
      %p242 = scmp.le.s32.totalorder 1, %s18
      %p243 = scmp.lt.s32.totalorder %s18, 3
      %p244 = pnand %p242, %p243
      %p245 = pneg %p244
      // Predicated region
      $region45: #{tpu_custom_call.1} parent=5 // pred_check
        _
      $region46: #{tpu_custom_call.1} parent=5 // pred_check_branch
        %247 = sbr.rel (%p244) target = $region48
      $region47: #{tpu_custom_call.1} parent=5 // pred_region
        %s248 = ssub.s32 %s18, 1
        %s249 = smul.u32 64, %s23
        %p250 = scmp.lt.s32.totalorder %s249, 127
        %s251 = scalar_select %p250, %s249, 127
        %s252 = smul.addr %s251, 8
        %s253 = scalar_lea.vmem %s0, %s252
        %p254 = pneg %p44
        %p255 = pneg %p41
        %p256 = pneg %p65
        %p257 = pneg %p62
        %p258 = pneg %p86
        %p259 = pneg %p83
        %p260 = pneg %p107
        %p261 = pneg %p104
        %p262 = pneg %p128
        %p263 = pneg %p125
        %p264 = pneg %p149
        %p265 = pneg %p146
        %p266 = pneg %p170
        %p267 = pneg %p167
        %p268 = pneg %p196
        %p269 = pneg %p193
        %s270 = sand.u32 %s183, 1
        %s271 = scalar_lea.sflag [#allocation4], %s270
        %s272 = sand.u32 %s183, 1
        %s273 = smul.addr %s272, 4
        %s274 = scalar_lea.vmem [#allocation3], %s273
        %s275 = smul.u32 64, %s23
        %p276 = scmp.lt.s32.totalorder %s275, 127
        %s277 = scalar_select %p276, %s275, 127
        %s278 = smul.addr %s277, 8
        %s279 = scalar_lea.vmem %s0, %s278
        %s280 = smul.u32 64, %s23
        %s281 = smul.u32 4, %s23
        %v282 = vld [vmem:[%s279] sm:$0xff]
        %v283 = vld [vmem:[%s279 + $0x8] sm:$0xff]
        %v284 = vld [vmem:[%s279 + $0x10] sm:$0xff]
        %v285 = vld [vmem:[%s279 + $0x18] sm:$0xff]
        %v286 = vld [vmem:[%s279 + $0x20] sm:$0xff]
        %v287 = vld [vmem:[%s279 + $0x28] sm:$0xff]
        %v288 = vld [vmem:[%s279 + $0x30] sm:$0xff]
        %v289 = vld [vmem:[%s279 + $0x38] sm:$0xff]
        %v290 = vld [vmem:[%s279 + $0x40] sm:$0xff]
        %v291 = vld [vmem:[%s279 + $0x48] sm:$0xff]
        %v292 = vld [vmem:[%s279 + $0x50] sm:$0xff]
        %v293 = vld [vmem:[%s279 + $0x58] sm:$0xff]
        %v294 = vld [vmem:[%s279 + $0x60] sm:$0xff]
        %v295 = vld [vmem:[%s279 + $0x68] sm:$0xff]
        %v296 = vld [vmem:[%s279 + $0x70] sm:$0xff]
        %v297 = vld [vmem:[%s279 + $0x78] sm:$0xff]
        %v298 = vld [vmem:[%s279 + $0x80] sm:$0xff]
        %v299 = vld [vmem:[%s279 + $0x88] sm:$0xff]
        %v300 = vld [vmem:[%s279 + $0x90] sm:$0xff]
        %v301 = vld [vmem:[%s279 + $0x98] sm:$0xff]
        %v302 = vld [vmem:[%s279 + $0xa0] sm:$0xff]
        %v303 = vld [vmem:[%s279 + $0xa8] sm:$0xff]
        %v304 = vld [vmem:[%s279 + $0xb0] sm:$0xff]
        %v305 = vld [vmem:[%s279 + $0xb8] sm:$0xff]
        %v306 = vld [vmem:[%s279 + $0xc0] sm:$0xff]
        %v307 = vld [vmem:[%s279 + $0xc8] sm:$0xff]
        %v308 = vld [vmem:[%s279 + $0xd0] sm:$0xff]
        %v309 = vld [vmem:[%s279 + $0xd8] sm:$0xff]
        %v310 = vld [vmem:[%s279 + $0xe0] sm:$0xff]
        %v311 = vld [vmem:[%s279 + $0xe8] sm:$0xff]
        %v312 = vld [vmem:[%s279 + $0xf0] sm:$0xff]
        %v313 = vld [vmem:[%s279 + $0xf8] sm:$0xff]
        %v314 = vld [vmem:[%s279 + $0x100] sm:$0xff]
        %v315 = vld [vmem:[%s279 + $0x108] sm:$0xff]
        %v316 = vld [vmem:[%s279 + $0x110] sm:$0xff]
        %v317 = vld [vmem:[%s279 + $0x118] sm:$0xff]
        %v318 = vld [vmem:[%s279 + $0x120] sm:$0xff]
        %v319 = vld [vmem:[%s279 + $0x128] sm:$0xff]
        %v320 = vld [vmem:[%s279 + $0x130] sm:$0xff]
        %v321 = vld [vmem:[%s279 + $0x138] sm:$0xff]
        %v322 = vld [vmem:[%s279 + $0x140] sm:$0xff]
        %v323 = vld [vmem:[%s279 + $0x148] sm:$0xff]
        %v324 = vld [vmem:[%s279 + $0x150] sm:$0xff]
        %v325 = vld [vmem:[%s279 + $0x158] sm:$0xff]
        %v326 = vld [vmem:[%s279 + $0x160] sm:$0xff]
        %v327 = vld [vmem:[%s279 + $0x168] sm:$0xff]
        %v328 = vld [vmem:[%s279 + $0x170] sm:$0xff]
        %v329 = vld [vmem:[%s279 + $0x178] sm:$0xff]
        %v330 = vld [vmem:[%s279 + $0x180] sm:$0xff]
        %v331 = vld [vmem:[%s279 + $0x188] sm:$0xff]
        %v332 = vld [vmem:[%s279 + $0x190] sm:$0xff]
        %v333 = vld [vmem:[%s279 + $0x198] sm:$0xff]
        %v334 = vld [vmem:[%s279 + $0x1a0] sm:$0xff]
        %v335 = vld [vmem:[%s279 + $0x1a8] sm:$0xff]
        %v336 = vld [vmem:[%s279 + $0x1b0] sm:$0xff]
        %v337 = vld [vmem:[%s279 + $0x1b8] sm:$0xff]
        %v338 = vld [vmem:[%s279 + $0x1c0] sm:$0xff]
        %v339 = vld [vmem:[%s279 + $0x1c8] sm:$0xff]
        %v340 = vld [vmem:[%s279 + $0x1d0] sm:$0xff]
        %v341 = vld [vmem:[%s279 + $0x1d8] sm:$0xff]
        %v342 = vld [vmem:[%s279 + $0x1e0] sm:$0xff]
        %v343 = vld [vmem:[%s279 + $0x1e8] sm:$0xff]
        %v344 = vld [vmem:[%s279 + $0x1f0] sm:$0xff]
        %v345 = vld [vmem:[%s279 + $0x1f8] sm:$0xff]
        %v346 = vld [vmem:[%s1] sm:$0xff]
        %v347 = vld [vmem:[%s1 + $0x8] sm:$0xff]
        %v348 = vld [vmem:[%s1 + $0x10] sm:$0xff]
        %v349 = vld [vmem:[%s1 + $0x18] sm:$0xff]
        %v350 = vld [vmem:[%s2] sm:$0x1]
        %v352 = vlaneseq
        %v353 = vshrl.u32 %v352, 7
        %v354 = vsub.s32 0, %v353
        %v355 = vrot.slane %v350, %v354
        %vm357 = vcmask 261120
        %v359 = vsel %vm357, %v282, 0
        %v362 = vsel %vm357, %v283, 0
        %v365 = vsel %vm357, %v284, 0
        %v368 = vsel %vm357, %v285, 0
        %v371 = vsel %vm357, %v286, 0
        %v374 = vsel %vm357, %v287, 0
        %v377 = vsel %vm357, %v288, 0
        %v380 = vsel %vm357, %v289, 0
        %v383 = vsel %vm357, %v290, 0
        %v386 = vsel %vm357, %v291, 0
        %v389 = vsel %vm357, %v292, 0
        %v392 = vsel %vm357, %v293, 0
        %v395 = vsel %vm357, %v294, 0
        %v398 = vsel %vm357, %v295, 0
        %v401 = vsel %vm357, %v296, 0
        %v404 = vsel %vm357, %v297, 0
        %v407 = vsel %vm357, %v298, 0
        %v410 = vsel %vm357, %v299, 0
        %v413 = vsel %vm357, %v300, 0
        %v416 = vsel %vm357, %v301, 0
        %v419 = vsel %vm357, %v302, 0
        %v422 = vsel %vm357, %v303, 0
        %v425 = vsel %vm357, %v304, 0
        %v428 = vsel %vm357, %v305, 0
        %v431 = vsel %vm357, %v306, 0
        %v434 = vsel %vm357, %v307, 0
        %v437 = vsel %vm357, %v308, 0
        %v440 = vsel %vm357, %v309, 0
        %v443 = vsel %vm357, %v310, 0
        %v446 = vsel %vm357, %v311, 0
        %v449 = vsel %vm357, %v312, 0
        %v452 = vsel %vm357, %v313, 0
        %v455 = vsel %vm357, %v314, 0
        %v458 = vsel %vm357, %v315, 0
        %v461 = vsel %vm357, %v316, 0
        %v464 = vsel %vm357, %v317, 0
        %v467 = vsel %vm357, %v318, 0
        %v470 = vsel %vm357, %v319, 0
        %v473 = vsel %vm357, %v320, 0
        %v476 = vsel %vm357, %v321, 0
        %v479 = vsel %vm357, %v322, 0
        %v482 = vsel %vm357, %v323, 0
        %v485 = vsel %vm357, %v324, 0
        %v488 = vsel %vm357, %v325, 0
        %v491 = vsel %vm357, %v326, 0
        %v494 = vsel %vm357, %v327, 0
        %v497 = vsel %vm357, %v328, 0
        %v500 = vsel %vm357, %v329, 0
        %v503 = vsel %vm357, %v330, 0
        %v506 = vsel %vm357, %v331, 0
        %v509 = vsel %vm357, %v332, 0
        %v512 = vsel %vm357, %v333, 0
        %v515 = vsel %vm357, %v334, 0
        %v518 = vsel %vm357, %v335, 0
        %v521 = vsel %vm357, %v336, 0
        %v524 = vsel %vm357, %v337, 0
        %v527 = vsel %vm357, %v338, 0
        %v530 = vsel %vm357, %v339, 0
        %v533 = vsel %vm357, %v340, 0
        %v536 = vsel %vm357, %v341, 0
        %v539 = vsel %vm357, %v342, 0
        %v542 = vsel %vm357, %v343, 0
        %v545 = vsel %vm357, %v344, 0
        %v548 = vsel %vm357, %v345, 0
        %550 = vmatprep.subr.mxu0 0.0
        %551 = vmatpush1.msra.mxu0 %v346
        %552 = vmatprep.subr.mxu0 0.0
        %553 = vmatpush1.msra.mxu0 %v347
        %554 = vmatprep.subr.mxu0 0.0
        %555 = vmatpush1.msra.mxu0 %v348
        %556 = vmatprep.subr.mxu0 0.0
        %557 = vmatpush1.msra.mxu0 %v349
        %558 = vmatprep.subr.mxu0 0.0
        %559 = vmatpush1.msra.mxu0 0.0
        %560 = vmatprep.subr.mxu0 0.0
        %561 = vmatpush1.msra.mxu0 0.0
        %562 = vmatprep.subr.mxu0 0.0
        %563 = vmatpush1.msra.mxu0 0.0
        %564 = vmatprep.subr.mxu0 0.0
        %565 = vmatpush1.msra.mxu0 0.0
        %566 = vmatprep.subr.mxu0 0.0
        %567 = vmatpush1.msra.mxu0 0.0
        %568 = vmatprep.subr.mxu0 0.0
        %569 = vmatpush1.msra.mxu0 0.0
        %570 = vmatprep.subr.mxu0 0.0
        %571 = vmatpush1.msra.mxu0 0.0
        %572 = vmatprep.subr.mxu0 0.0
        %573 = vmatpush1.msra.mxu0 0.0
        %574 = vmatprep.subr.mxu0 0.0
        %575 = vmatpush1.msra.mxu0 0.0
        %576 = vmatprep.subr.mxu0 0.0
        %577 = vmatpush1.msra.mxu0 0.0
        %578 = vmatprep.subr.mxu0 0.0
        %579 = vmatpush1.msra.mxu0 0.0
        %580 = vmatprep.subr.mxu0 0.0
        %581 = vmatpush1.msra.mxu0 0.0
        %582 = vmatprep.subr.mxu0 0.0
        %583 = vmatpush1.msra.mxu0 0.0
        %584 = vmatprep.subr.mxu0 0.0
        %585 = vmatpush1.msra.mxu0 0.0
        %586 = vmatprep.subr.mxu0 0.0
        %587 = vmatpush1.msra.mxu0 0.0
        %588 = vmatprep.subr.mxu0 0.0
        %589 = vmatpush1.msra.mxu0 0.0
        %590 = vmatprep.subr.mxu0 0.0
        %591 = vmatpush1.msra.mxu0 0.0
        %592 = vmatprep.subr.mxu0 0.0
        %593 = vmatpush1.msra.mxu0 0.0
        %594 = vmatprep.subr.mxu0 0.0
        %595 = vmatpush1.msra.mxu0 0.0
        %596 = vmatprep.subr.mxu0 0.0
        %597 = vmatpush1.msra.mxu0 0.0
        %598 = vmatprep.subr.mxu0 0.0
        %599 = vmatpush1.msra.mxu0 0.0
        %600 = vmatprep.subr.mxu0 0.0
        %601 = vmatpush1.msra.mxu0 0.0
        %602 = vmatprep.subr.mxu0 0.0
        %603 = vmatpush1.msra.mxu0 0.0
        %604 = vmatprep.subr.mxu0 0.0
        %605 = vmatpush1.msra.mxu0 0.0
        %606 = vmatprep.subr.mxu0 0.0
        %607 = vmatpush1.msra.mxu0 0.0
        %608 = vmatprep.subr.mxu0 0.0
        %609 = vmatpush1.msra.mxu0 0.0
        %610 = vmatprep.subr.mxu0 0.0
        %611 = vmatpush1.msra.mxu0 0.0
        %612 = vmatprep.subr.mxu0 0.0
        %613 = vmatpush1.msra.mxu0 0.0
        %614 = vmatprep.mubr.f32.mxu0 0.0
        %615 = vmatmul.mubr.f32.gmra.mrb[0].mxu0 %v359
        %v616 = vpop.f32.mrb[0].mxu0
        %v617 = vadd.f32 %v355, %v616
        %v618 = vpop.f32.mrb[0].mxu0
        %619 = vmatprep.mubr.f32.mxu0 0.0
        %620 = vmatmul.mubr.f32.gmra.mrb[0].mxu0 %v362
        %v621 = vpop.f32.mrb[0].mxu0
        %v622 = vadd.f32 %v355, %v621
        %v623 = vpop.f32.mrb[0].mxu0
        %624 = vmatprep.mubr.f32.mxu0 0.0
        %625 = vmatmul.mubr.f32.gmra.mrb[0].mxu0 %v365
        %v626 = vpop.f32.mrb[0].mxu0
        %v627 = vadd.f32 %v355, %v626
        %v628 = vpop.f32.mrb[0].mxu0
        %629 = vmatprep.mubr.f32.mxu0 0.0
        %630 = vmatmul.mubr.f32.gmra.mrb[0].mxu0 %v368
        %v631 = vpop.f32.mrb[0].mxu0
        %v632 = vadd.f32 %v355, %v631
        %v633 = vpop.f32.mrb[0].mxu0
        %634 = vmatprep.mubr.f32.mxu0 0.0
        %635 = vmatmul.mubr.f32.gmra.mrb[0].mxu0 %v371
        %v636 = vpop.f32.mrb[0].mxu0
        %v637 = vadd.f32 %v355, %v636
        %v638 = vpop.f32.mrb[0].mxu0
        %639 = vmatprep.mubr.f32.mxu0 0.0
        %640 = vmatmul.mubr.f32.gmra.mrb[0].mxu0 %v374
        %v641 = vpop.f32.mrb[0].mxu0
        %v642 = vadd.f32 %v355, %v641
        %v643 = vpop.f32.mrb[0].mxu0
        %644 = vmatprep.mubr.f32.mxu0 0.0
        %645 = vmatmul.mubr.f32.gmra.mrb[0].mxu0 %v377
        %v646 = vpop.f32.mrb[0].mxu0
        %v647 = vadd.f32 %v355, %v646
        %v648 = vpop.f32.mrb[0].mxu0
        %649 = vmatprep.mubr.f32.mxu0 0.0
        %650 = vmatmul.mubr.f32.gmra.mrb[0].mxu0 %v380
        %v651 = vpop.f32.mrb[0].mxu0
        %v652 = vadd.f32 %v355, %v651
        %v653 = vpop.f32.mrb[0].mxu0
        %654 = vmatprep.mubr.f32.mxu0 0.0
        %655 = vmatmul.mubr.f32.gmra.mrb[0].mxu0 %v383
        %v656 = vpop.f32.mrb[0].mxu0
        %v657 = vadd.f32 %v355, %v656
        %v658 = vpop.f32.mrb[0].mxu0
        %659 = vmatprep.mubr.f32.mxu0 0.0
        %660 = vmatmul.mubr.f32.gmra.mrb[0].mxu0 %v386
        %v661 = vpop.f32.mrb[0].mxu0
        %v662 = vadd.f32 %v355, %v661
        %v663 = vpop.f32.mrb[0].mxu0
        %664 = vmatprep.mubr.f32.mxu0 0.0
        %665 = vmatmul.mubr.f32.gmra.mrb[0].mxu0 %v389
        %v666 = vpop.f32.mrb[0].mxu0
        %v667 = vadd.f32 %v355, %v666
        %v668 = vpop.f32.mrb[0].mxu0
        %669 = vmatprep.mubr.f32.mxu0 0.0
        %670 = vmatmul.mubr.f32.gmra.mrb[0].mxu0 %v392
        %v671 = vpop.f32.mrb[0].mxu0
        %v672 = vadd.f32 %v355, %v671
        %v673 = vpop.f32.mrb[0].mxu0
        %674 = vmatprep.mubr.f32.mxu0 0.0
        %675 = vmatmul.mubr.f32.gmra.mrb[0].mxu0 %v395
        %v676 = vpop.f32.mrb[0].mxu0
        %v677 = vadd.f32 %v355, %v676
        %v678 = vpop.f32.mrb[0].mxu0
        %679 = vmatprep.mubr.f32.mxu0 0.0
        %680 = vmatmul.mubr.f32.gmra.mrb[0].mxu0 %v398
        %v681 = vpop.f32.mrb[0].mxu0
        %v682 = vadd.f32 %v355, %v681
        %v683 = vpop.f32.mrb[0].mxu0
        %684 = vmatprep.mubr.f32.mxu0 0.0
        %685 = vmatmul.mubr.f32.gmra.mrb[0].mxu0 %v401
        %v686 = vpop.f32.mrb[0].mxu0
        %v687 = vadd.f32 %v355, %v686
        %v688 = vpop.f32.mrb[0].mxu0
        %689 = vmatprep.mubr.f32.mxu0 0.0
        %690 = vmatmul.mubr.f32.gmra.mrb[0].mxu0 %v404
        %v691 = vpop.f32.mrb[0].mxu0
        %v692 = vadd.f32 %v355, %v691
        %v693 = vpop.f32.mrb[0].mxu0
        %694 = vmatprep.mubr.f32.mxu0 0.0
        %695 = vmatmul.mubr.f32.gmra.mrb[0].mxu0 %v407
        %v696 = vpop.f32.mrb[0].mxu0
        %v697 = vadd.f32 %v355, %v696
        %v698 = vpop.f32.mrb[0].mxu0
        %699 = vmatprep.mubr.f32.mxu0 0.0
        %700 = vmatmul.mubr.f32.gmra.mrb[0].mxu0 %v410
        %v701 = vpop.f32.mrb[0].mxu0
        %v702 = vadd.f32 %v355, %v701
        %v703 = vpop.f32.mrb[0].mxu0
        %704 = vmatprep.mubr.f32.mxu0 0.0
        %705 = vmatmul.mubr.f32.gmra.mrb[0].mxu0 %v413
        %v706 = vpop.f32.mrb[0].mxu0
        %v707 = vadd.f32 %v355, %v706
        %v708 = vpop.f32.mrb[0].mxu0
        %709 = vmatprep.mubr.f32.mxu0 0.0
        %710 = vmatmul.mubr.f32.gmra.mrb[0].mxu0 %v416
        %v711 = vpop.f32.mrb[0].mxu0
        %v712 = vadd.f32 %v355, %v711
        %v713 = vpop.f32.mrb[0].mxu0
        %714 = vmatprep.mubr.f32.mxu0 0.0
        %715 = vmatmul.mubr.f32.gmra.mrb[0].mxu0 %v419
        %v716 = vpop.f32.mrb[0].mxu0
        %v717 = vadd.f32 %v355, %v716
        %v718 = vpop.f32.mrb[0].mxu0
        %719 = vmatprep.mubr.f32.mxu0 0.0
        %720 = vmatmul.mubr.f32.gmra.mrb[0].mxu0 %v422
        %v721 = vpop.f32.mrb[0].mxu0
        %v722 = vadd.f32 %v355, %v721
        %v723 = vpop.f32.mrb[0].mxu0
        %724 = vmatprep.mubr.f32.mxu0 0.0
        %725 = vmatmul.mubr.f32.gmra.mrb[0].mxu0 %v425
        %v726 = vpop.f32.mrb[0].mxu0
        %v727 = vadd.f32 %v355, %v726
        %v728 = vpop.f32.mrb[0].mxu0
        %729 = vmatprep.mubr.f32.mxu0 0.0
        %730 = vmatmul.mubr.f32.gmra.mrb[0].mxu0 %v428
        %v731 = vpop.f32.mrb[0].mxu0
        %v732 = vadd.f32 %v355, %v731
        %v733 = vpop.f32.mrb[0].mxu0
        %734 = vmatprep.mubr.f32.mxu0 0.0
        %735 = vmatmul.mubr.f32.gmra.mrb[0].mxu0 %v431
        %v736 = vpop.f32.mrb[0].mxu0
        %v737 = vadd.f32 %v355, %v736
        %v738 = vpop.f32.mrb[0].mxu0
        %739 = vmatprep.mubr.f32.mxu0 0.0
        %740 = vmatmul.mubr.f32.gmra.mrb[0].mxu0 %v434
        %v741 = vpop.f32.mrb[0].mxu0
        %v742 = vadd.f32 %v355, %v741
        %v743 = vpop.f32.mrb[0].mxu0
        %744 = vmatprep.mubr.f32.mxu0 0.0
        %745 = vmatmul.mubr.f32.gmra.mrb[0].mxu0 %v437
        %v746 = vpop.f32.mrb[0].mxu0
        %v747 = vadd.f32 %v355, %v746
        %v748 = vpop.f32.mrb[0].mxu0
        %749 = vmatprep.mubr.f32.mxu0 0.0
        %750 = vmatmul.mubr.f32.gmra.mrb[0].mxu0 %v440
        %v751 = vpop.f32.mrb[0].mxu0
        %v752 = vadd.f32 %v355, %v751
        %v753 = vpop.f32.mrb[0].mxu0
        %754 = vmatprep.mubr.f32.mxu0 0.0
        %755 = vmatmul.mubr.f32.gmra.mrb[0].mxu0 %v443
        %v756 = vpop.f32.mrb[0].mxu0
        %v757 = vadd.f32 %v355, %v756
        %v758 = vpop.f32.mrb[0].mxu0
        %759 = vmatprep.mubr.f32.mxu0 0.0
        %760 = vmatmul.mubr.f32.gmra.mrb[0].mxu0 %v446
        %v761 = vpop.f32.mrb[0].mxu0
        %v762 = vadd.f32 %v355, %v761
        %v763 = vpop.f32.mrb[0].mxu0
        %764 = vmatprep.mubr.f32.mxu0 0.0
        %765 = vmatmul.mubr.f32.gmra.mrb[0].mxu0 %v449
        %v766 = vpop.f32.mrb[0].mxu0
        %v767 = vadd.f32 %v355, %v766
        %v768 = vpop.f32.mrb[0].mxu0
        %769 = vmatprep.mubr.f32.mxu0 0.0
        %770 = vmatmul.mubr.f32.gmra.mrb[0].mxu0 %v452
        %v771 = vpop.f32.mrb[0].mxu0
        %v772 = vadd.f32 %v355, %v771
        %v773 = vpop.f32.mrb[0].mxu0
        %774 = vmatprep.mubr.f32.mxu0 0.0
        %775 = vmatmul.mubr.f32.gmra.mrb[0].mxu0 %v455
        %v776 = vpop.f32.mrb[0].mxu0
        %v777 = vadd.f32 %v355, %v776
        %v778 = vpop.f32.mrb[0].mxu0
        %779 = vmatprep.mubr.f32.mxu0 0.0
        %780 = vmatmul.mubr.f32.gmra.mrb[0].mxu0 %v458
        %v781 = vpop.f32.mrb[0].mxu0
        %v782 = vadd.f32 %v355, %v781
        %v783 = vpop.f32.mrb[0].mxu0
        %784 = vmatprep.mubr.f32.mxu0 0.0
        %785 = vmatmul.mubr.f32.gmra.mrb[0].mxu0 %v461
        %v786 = vpop.f32.mrb[0].mxu0
        %v787 = vadd.f32 %v355, %v786
        %v788 = vpop.f32.mrb[0].mxu0
        %789 = vmatprep.mubr.f32.mxu0 0.0
        %790 = vmatmul.mubr.f32.gmra.mrb[0].mxu0 %v464
        %v791 = vpop.f32.mrb[0].mxu0
        %v792 = vadd.f32 %v355, %v791
        %v793 = vpop.f32.mrb[0].mxu0
        %794 = vmatprep.mubr.f32.mxu0 0.0
        %795 = vmatmul.mubr.f32.gmra.mrb[0].mxu0 %v467
        %v796 = vpop.f32.mrb[0].mxu0
        %v797 = vadd.f32 %v355, %v796
        %v798 = vpop.f32.mrb[0].mxu0
        %799 = vmatprep.mubr.f32.mxu0 0.0
        %800 = vmatmul.mubr.f32.gmra.mrb[0].mxu0 %v470
        %v801 = vpop.f32.mrb[0].mxu0
        %v802 = vadd.f32 %v355, %v801
        %v803 = vpop.f32.mrb[0].mxu0
        %804 = vmatprep.mubr.f32.mxu0 0.0
        %805 = vmatmul.mubr.f32.gmra.mrb[0].mxu0 %v473
        %v806 = vpop.f32.mrb[0].mxu0
        %v807 = vadd.f32 %v355, %v806
        %v808 = vpop.f32.mrb[0].mxu0
        %809 = vmatprep.mubr.f32.mxu0 0.0
        %810 = vmatmul.mubr.f32.gmra.mrb[0].mxu0 %v476
        %v811 = vpop.f32.mrb[0].mxu0
        %v812 = vadd.f32 %v355, %v811
        %v813 = vpop.f32.mrb[0].mxu0
        %814 = vmatprep.mubr.f32.mxu0 0.0
        %815 = vmatmul.mubr.f32.gmra.mrb[0].mxu0 %v479
        %v816 = vpop.f32.mrb[0].mxu0
        %v817 = vadd.f32 %v355, %v816
        %v818 = vpop.f32.mrb[0].mxu0
        %819 = vmatprep.mubr.f32.mxu0 0.0
        %820 = vmatmul.mubr.f32.gmra.mrb[0].mxu0 %v482
        %v821 = vpop.f32.mrb[0].mxu0
        %v822 = vadd.f32 %v355, %v821
        %v823 = vpop.f32.mrb[0].mxu0
        %824 = vmatprep.mubr.f32.mxu0 0.0
        %825 = vmatmul.mubr.f32.gmra.mrb[0].mxu0 %v485
        %v826 = vpop.f32.mrb[0].mxu0
        %v827 = vadd.f32 %v355, %v826
        %v828 = vpop.f32.mrb[0].mxu0
        %829 = vmatprep.mubr.f32.mxu0 0.0
        %830 = vmatmul.mubr.f32.gmra.mrb[0].mxu0 %v488
        %v831 = vpop.f32.mrb[0].mxu0
        %v832 = vadd.f32 %v355, %v831
        %v833 = vpop.f32.mrb[0].mxu0
        %834 = vmatprep.mubr.f32.mxu0 0.0
        %835 = vmatmul.mubr.f32.gmra.mrb[0].mxu0 %v491
        %v836 = vpop.f32.mrb[0].mxu0
        %v837 = vadd.f32 %v355, %v836
        %v838 = vpop.f32.mrb[0].mxu0
        %839 = vmatprep.mubr.f32.mxu0 0.0
        %840 = vmatmul.mubr.f32.gmra.mrb[0].mxu0 %v494
        %v841 = vpop.f32.mrb[0].mxu0
        %v842 = vadd.f32 %v355, %v841
        %v843 = vpop.f32.mrb[0].mxu0
        %844 = vmatprep.mubr.f32.mxu0 0.0
        %845 = vmatmul.mubr.f32.gmra.mrb[0].mxu0 %v497
        %v846 = vpop.f32.mrb[0].mxu0
        %v847 = vadd.f32 %v355, %v846
        %v848 = vpop.f32.mrb[0].mxu0
        %849 = vmatprep.mubr.f32.mxu0 0.0
        %850 = vmatmul.mubr.f32.gmra.mrb[0].mxu0 %v500
        %v851 = vpop.f32.mrb[0].mxu0
        %v852 = vadd.f32 %v355, %v851
        %v853 = vpop.f32.mrb[0].mxu0
        %854 = vmatprep.mubr.f32.mxu0 0.0
        %855 = vmatmul.mubr.f32.gmra.mrb[0].mxu0 %v503
        %v856 = vpop.f32.mrb[0].mxu0
        %v857 = vadd.f32 %v355, %v856
        %v858 = vpop.f32.mrb[0].mxu0
        %859 = vmatprep.mubr.f32.mxu0 0.0
        %860 = vmatmul.mubr.f32.gmra.mrb[0].mxu0 %v506
        %v861 = vpop.f32.mrb[0].mxu0
        %v862 = vadd.f32 %v355, %v861
        %v863 = vpop.f32.mrb[0].mxu0
        %864 = vmatprep.mubr.f32.mxu0 0.0
        %865 = vmatmul.mubr.f32.gmra.mrb[0].mxu0 %v509
        %v866 = vpop.f32.mrb[0].mxu0
        %v867 = vadd.f32 %v355, %v866
        %v868 = vpop.f32.mrb[0].mxu0
        %869 = vmatprep.mubr.f32.mxu0 0.0
        %870 = vmatmul.mubr.f32.gmra.mrb[0].mxu0 %v512
        %v871 = vpop.f32.mrb[0].mxu0
        %v872 = vadd.f32 %v355, %v871
        %v873 = vpop.f32.mrb[0].mxu0
        %874 = vmatprep.mubr.f32.mxu0 0.0
        %875 = vmatmul.mubr.f32.gmra.mrb[0].mxu0 %v515
        %v876 = vpop.f32.mrb[0].mxu0
        %v877 = vadd.f32 %v355, %v876
        %v878 = vpop.f32.mrb[0].mxu0
        %879 = vmatprep.mubr.f32.mxu0 0.0
        %880 = vmatmul.mubr.f32.gmra.mrb[0].mxu0 %v518
        %v881 = vpop.f32.mrb[0].mxu0
        %v882 = vadd.f32 %v355, %v881
        %v883 = vpop.f32.mrb[0].mxu0
        %884 = vmatprep.mubr.f32.mxu0 0.0
        %885 = vmatmul.mubr.f32.gmra.mrb[0].mxu0 %v521
        %v886 = vpop.f32.mrb[0].mxu0
        %v887 = vadd.f32 %v355, %v886
        %v888 = vpop.f32.mrb[0].mxu0
        %889 = vmatprep.mubr.f32.mxu0 0.0
        %890 = vmatmul.mubr.f32.gmra.mrb[0].mxu0 %v524
        %v891 = vpop.f32.mrb[0].mxu0
        %v892 = vadd.f32 %v355, %v891
        %v893 = vpop.f32.mrb[0].mxu0
        %894 = vmatprep.mubr.f32.mxu0 0.0
        %895 = vmatmul.mubr.f32.gmra.mrb[0].mxu0 %v527
        %v896 = vpop.f32.mrb[0].mxu0
        %v897 = vadd.f32 %v355, %v896
        %v898 = vpop.f32.mrb[0].mxu0
        %899 = vmatprep.mubr.f32.mxu0 0.0
        %900 = vmatmul.mubr.f32.gmra.mrb[0].mxu0 %v530
        %v901 = vpop.f32.mrb[0].mxu0
        %v902 = vadd.f32 %v355, %v901
        %v903 = vpop.f32.mrb[0].mxu0
        %904 = vmatprep.mubr.f32.mxu0 0.0
        %905 = vmatmul.mubr.f32.gmra.mrb[0].mxu0 %v533
        %v906 = vpop.f32.mrb[0].mxu0
        %v907 = vadd.f32 %v355, %v906
        %v908 = vpop.f32.mrb[0].mxu0
        %909 = vmatprep.mubr.f32.mxu0 0.0
        %910 = vmatmul.mubr.f32.gmra.mrb[0].mxu0 %v536
        %v911 = vpop.f32.mrb[0].mxu0
        %v912 = vadd.f32 %v355, %v911
        %v913 = vpop.f32.mrb[0].mxu0
        %914 = vmatprep.mubr.f32.mxu0 0.0
        %915 = vmatmul.mubr.f32.gmra.mrb[0].mxu0 %v539
        %v916 = vpop.f32.mrb[0].mxu0
        %v917 = vadd.f32 %v355, %v916
        %v918 = vpop.f32.mrb[0].mxu0
        %919 = vmatprep.mubr.f32.mxu0 0.0
        %920 = vmatmul.mubr.f32.gmra.mrb[0].mxu0 %v542
        %v921 = vpop.f32.mrb[0].mxu0
        %v922 = vadd.f32 %v355, %v921
        %v923 = vpop.f32.mrb[0].mxu0
        %924 = vmatprep.mubr.f32.mxu0 0.0
        %925 = vmatmul.mubr.f32.gmra.mrb[0].mxu0 %v545
        %v926 = vpop.f32.mrb[0].mxu0
        %v927 = vadd.f32 %v355, %v926
        %v928 = vpop.f32.mrb[0].mxu0
        %929 = vmatprep.mubr.f32.mxu0 0.0
        %930 = vmatmul.mubr.f32.gmra.mrb[0].mxu0 %v548
        %v931 = vpop.f32.mrb[0].mxu0
        %v932 = vadd.f32 %v355, %v931
        %v933 = vpop.f32.mrb[0].mxu0
        %934 = vdwg.mxu0
        %v935 = vmax.f32 %v617, 0.0
        %v936 = vmax.f32 %v622, 0.0
        %v937 = vmax.f32 %v627, 0.0
        %v938 = vmax.f32 %v632, 0.0
        %v939 = vmax.f32 %v637, 0.0
        %v940 = vmax.f32 %v642, 0.0
        %v941 = vmax.f32 %v647, 0.0
        %v942 = vmax.f32 %v652, 0.0
        %v943 = vmax.f32 %v657, 0.0
        %v944 = vmax.f32 %v662, 0.0
        %v945 = vmax.f32 %v667, 0.0
        %v946 = vmax.f32 %v672, 0.0
        %v947 = vmax.f32 %v677, 0.0
        %v948 = vmax.f32 %v682, 0.0
        %v949 = vmax.f32 %v687, 0.0
        %v950 = vmax.f32 %v692, 0.0
        %v951 = vmax.f32 %v697, 0.0
        %v952 = vmax.f32 %v702, 0.0
        %v953 = vmax.f32 %v707, 0.0
        %v954 = vmax.f32 %v712, 0.0
        %v955 = vmax.f32 %v717, 0.0
        %v956 = vmax.f32 %v722, 0.0
        %v957 = vmax.f32 %v727, 0.0
        %v958 = vmax.f32 %v732, 0.0
        %v959 = vmax.f32 %v737, 0.0
        %v960 = vmax.f32 %v742, 0.0
        %v961 = vmax.f32 %v747, 0.0
        %v962 = vmax.f32 %v752, 0.0
        %v963 = vmax.f32 %v757, 0.0
        %v964 = vmax.f32 %v762, 0.0
        %v965 = vmax.f32 %v767, 0.0
        %v966 = vmax.f32 %v772, 0.0
        %v967 = vmax.f32 %v777, 0.0
        %v968 = vmax.f32 %v782, 0.0
        %v969 = vmax.f32 %v787, 0.0
        %v970 = vmax.f32 %v792, 0.0
        %v971 = vmax.f32 %v797, 0.0
        %v972 = vmax.f32 %v802, 0.0
        %v973 = vmax.f32 %v807, 0.0
        %v974 = vmax.f32 %v812, 0.0
        %v975 = vmax.f32 %v817, 0.0
        %v976 = vmax.f32 %v822, 0.0
        %v977 = vmax.f32 %v827, 0.0
        %v978 = vmax.f32 %v832, 0.0
        %v979 = vmax.f32 %v837, 0.0
        %v980 = vmax.f32 %v842, 0.0
        %v981 = vmax.f32 %v847, 0.0
        %v982 = vmax.f32 %v852, 0.0
        %v983 = vmax.f32 %v857, 0.0
        %v984 = vmax.f32 %v862, 0.0
        %v985 = vmax.f32 %v867, 0.0
        %v986 = vmax.f32 %v872, 0.0
        %v987 = vmax.f32 %v877, 0.0
        %v988 = vmax.f32 %v882, 0.0
        %v989 = vmax.f32 %v887, 0.0
        %v990 = vmax.f32 %v892, 0.0
        %v991 = vmax.f32 %v897, 0.0
        %v992 = vmax.f32 %v902, 0.0
        %v993 = vmax.f32 %v907, 0.0
        %v994 = vmax.f32 %v912, 0.0
        %v995 = vmax.f32 %v917, 0.0
        %v996 = vmax.f32 %v922, 0.0
        %v997 = vmax.f32 %v927, 0.0
        %v998 = vmax.f32 %v932, 0.0
        %v999 = vld [vmem:[%s3] sm:$0xff]
        %v1000 = vld [vmem:[%s3 + $0x8] sm:$0x3]
        %v1001 = vld [vmem:[%s4] sm:$0x1]
        %v1003 = vlaneseq
        %v1004 = vshrl.u32 %v1003, 7
        %v1005 = vsub.s32 0, %v1004
        %v1006 = vrot.slane %v1001, %v1005
        %vm1008 = vcmask 80896
        %v1010 = vsel %vm1008, %v935, 0
        %v1013 = vsel %vm1008, %v936, 0
        %v1016 = vsel %vm1008, %v937, 0
        %v1019 = vsel %vm1008, %v938, 0
        %v1022 = vsel %vm1008, %v939, 0
        %v1025 = vsel %vm1008, %v940, 0
        %v1028 = vsel %vm1008, %v941, 0
        %v1031 = vsel %vm1008, %v942, 0
        %v1034 = vsel %vm1008, %v943, 0
        %v1037 = vsel %vm1008, %v944, 0
        %v1040 = vsel %vm1008, %v945, 0
        %v1043 = vsel %vm1008, %v946, 0
        %v1046 = vsel %vm1008, %v947, 0
        %v1049 = vsel %vm1008, %v948, 0
        %v1052 = vsel %vm1008, %v949, 0
        %v1055 = vsel %vm1008, %v950, 0
        %v1058 = vsel %vm1008, %v951, 0
        %v1061 = vsel %vm1008, %v952, 0
        %v1064 = vsel %vm1008, %v953, 0
        %v1067 = vsel %vm1008, %v954, 0
        %v1070 = vsel %vm1008, %v955, 0
        %v1073 = vsel %vm1008, %v956, 0
        %v1076 = vsel %vm1008, %v957, 0
        %v1079 = vsel %vm1008, %v958, 0
        %v1082 = vsel %vm1008, %v959, 0
        %v1085 = vsel %vm1008, %v960, 0
        %v1088 = vsel %vm1008, %v961, 0
        %v1091 = vsel %vm1008, %v962, 0
        %v1094 = vsel %vm1008, %v963, 0
        %v1097 = vsel %vm1008, %v964, 0
        %v1100 = vsel %vm1008, %v965, 0
        %v1103 = vsel %vm1008, %v966, 0
        %v1106 = vsel %vm1008, %v967, 0
        %v1109 = vsel %vm1008, %v968, 0
        %v1112 = vsel %vm1008, %v969, 0
        %v1115 = vsel %vm1008, %v970, 0
        %v1118 = vsel %vm1008, %v971, 0
        %v1121 = vsel %vm1008, %v972, 0
        %v1124 = vsel %vm1008, %v973, 0
        %v1127 = vsel %vm1008, %v974, 0
        %v1130 = vsel %vm1008, %v975, 0
        %v1133 = vsel %vm1008, %v976, 0
        %v1136 = vsel %vm1008, %v977, 0
        %v1139 = vsel %vm1008, %v978, 0
        %v1142 = vsel %vm1008, %v979, 0
        %v1145 = vsel %vm1008, %v980, 0
        %v1148 = vsel %vm1008, %v981, 0
        %v1151 = vsel %vm1008, %v982, 0
        %v1154 = vsel %vm1008, %v983, 0
        %v1157 = vsel %vm1008, %v984, 0
        %v1160 = vsel %vm1008, %v985, 0
        %v1163 = vsel %vm1008, %v986, 0
        %v1166 = vsel %vm1008, %v987, 0
        %v1169 = vsel %vm1008, %v988, 0
        %v1172 = vsel %vm1008, %v989, 0
        %v1175 = vsel %vm1008, %v990, 0
        %v1178 = vsel %vm1008, %v991, 0
        %v1181 = vsel %vm1008, %v992, 0
        %v1184 = vsel %vm1008, %v993, 0
        %v1187 = vsel %vm1008, %v994, 0
        %v1190 = vsel %vm1008, %v995, 0
        %v1193 = vsel %vm1008, %v996, 0
        %v1196 = vsel %vm1008, %v997, 0
        %v1199 = vsel %vm1008, %v998, 0
        %vm1201 = vcmask 1041408
        %v1203 = vsel %vm1201, %v1000, 0
        %1205 = vmatprep.subr.mxu0 0.0
        %1206 = vmatpush1.msra.mxu0 %v999
        %1207 = vmatprep.subr.mxu0 0.0
        %1208 = vmatpush1.msra.mxu0 %v1203
        %1209 = vmatprep.subr.mxu0 0.0
        %1210 = vmatpush1.msra.mxu0 0.0
        %1211 = vmatprep.subr.mxu0 0.0
        %1212 = vmatpush1.msra.mxu0 0.0
        %1213 = vmatprep.subr.mxu0 0.0
        %1214 = vmatpush1.msra.mxu0 0.0
        %1215 = vmatprep.subr.mxu0 0.0
        %1216 = vmatpush1.msra.mxu0 0.0
        %1217 = vmatprep.subr.mxu0 0.0
        %1218 = vmatpush1.msra.mxu0 0.0
        %1219 = vmatprep.subr.mxu0 0.0
        %1220 = vmatpush1.msra.mxu0 0.0
        %1221 = vmatprep.subr.mxu0 0.0
        %1222 = vmatpush1.msra.mxu0 0.0
        %1223 = vmatprep.subr.mxu0 0.0
        %1224 = vmatpush1.msra.mxu0 0.0
        %1225 = vmatprep.subr.mxu0 0.0
        %1226 = vmatpush1.msra.mxu0 0.0
        %1227 = vmatprep.subr.mxu0 0.0
        %1228 = vmatpush1.msra.mxu0 0.0
        %1229 = vmatprep.subr.mxu0 0.0
        %1230 = vmatpush1.msra.mxu0 0.0
        %1231 = vmatprep.subr.mxu0 0.0
        %1232 = vmatpush1.msra.mxu0 0.0
        %1233 = vmatprep.subr.mxu0 0.0
        %1234 = vmatpush1.msra.mxu0 0.0
        %1235 = vmatprep.subr.mxu0 0.0
        %1236 = vmatpush1.msra.mxu0 0.0
        %1237 = vmatprep.subr.mxu0 0.0
        %1238 = vmatpush1.msra.mxu0 0.0
        %1239 = vmatprep.subr.mxu0 0.0
        %1240 = vmatpush1.msra.mxu0 0.0
        %1241 = vmatprep.subr.mxu0 0.0
        %1242 = vmatpush1.msra.mxu0 0.0
        %1243 = vmatprep.subr.mxu0 0.0
        %1244 = vmatpush1.msra.mxu0 0.0
        %1245 = vmatprep.subr.mxu0 0.0
        %1246 = vmatpush1.msra.mxu0 0.0
        %1247 = vmatprep.subr.mxu0 0.0
        %1248 = vmatpush1.msra.mxu0 0.0
        %1249 = vmatprep.subr.mxu0 0.0
        %1250 = vmatpush1.msra.mxu0 0.0
        %1251 = vmatprep.subr.mxu0 0.0
        %1252 = vmatpush1.msra.mxu0 0.0
        %1253 = vmatprep.subr.mxu0 0.0
        %1254 = vmatpush1.msra.mxu0 0.0
        %1255 = vmatprep.subr.mxu0 0.0
        %1256 = vmatpush1.msra.mxu0 0.0
        %1257 = vmatprep.subr.mxu0 0.0
        %1258 = vmatpush1.msra.mxu0 0.0
        %1259 = vmatprep.subr.mxu0 0.0
        %1260 = vmatpush1.msra.mxu0 0.0
        %1261 = vmatprep.subr.mxu0 0.0
        %1262 = vmatpush1.msra.mxu0 0.0
        %1263 = vmatprep.subr.mxu0 0.0
        %1264 = vmatpush1.msra.mxu0 0.0
        %1265 = vmatprep.subr.mxu0 0.0
        %1266 = vmatpush1.msra.mxu0 0.0
        %1267 = vmatprep.subr.mxu0 0.0
        %1268 = vmatpush1.msra.mxu0 0.0
        %1269 = vmatprep.mubr.f32.mxu0 0.0
        %1270 = vmatmul.mubr.f32.gmra.mrb[0].mxu0 %v1010
        %v1271 = vpop.f32.mrb[0].mxu0
        %v1272 = vadd.f32 %v1006, %v1271
        %v1273 = vpop.f32.mrb[0].mxu0
        %1274 = vmatprep.mubr.f32.mxu0 0.0
        %1275 = vmatmul.mubr.f32.gmra.mrb[0].mxu0 %v1013
        %v1276 = vpop.f32.mrb[0].mxu0
        %v1277 = vadd.f32 %v1006, %v1276
        %v1278 = vpop.f32.mrb[0].mxu0
        %1279 = vmatprep.mubr.f32.mxu0 0.0
        %1280 = vmatmul.mubr.f32.gmra.mrb[0].mxu0 %v1016
        %v1281 = vpop.f32.mrb[0].mxu0
        %v1282 = vadd.f32 %v1006, %v1281
        %v1283 = vpop.f32.mrb[0].mxu0
        %1284 = vmatprep.mubr.f32.mxu0 0.0
        %1285 = vmatmul.mubr.f32.gmra.mrb[0].mxu0 %v1019
        %v1286 = vpop.f32.mrb[0].mxu0
        %v1287 = vadd.f32 %v1006, %v1286
        %v1288 = vpop.f32.mrb[0].mxu0
        %1289 = vmatprep.mubr.f32.mxu0 0.0
        %1290 = vmatmul.mubr.f32.gmra.mrb[0].mxu0 %v1022
        %v1291 = vpop.f32.mrb[0].mxu0
        %v1292 = vadd.f32 %v1006, %v1291
        %v1293 = vpop.f32.mrb[0].mxu0
        %1294 = vmatprep.mubr.f32.mxu0 0.0
        %1295 = vmatmul.mubr.f32.gmra.mrb[0].mxu0 %v1025
        %v1296 = vpop.f32.mrb[0].mxu0
        %v1297 = vadd.f32 %v1006, %v1296
        %v1298 = vpop.f32.mrb[0].mxu0
        %1299 = vmatprep.mubr.f32.mxu0 0.0
        %1300 = vmatmul.mubr.f32.gmra.mrb[0].mxu0 %v1028
        %v1301 = vpop.f32.mrb[0].mxu0
        %v1302 = vadd.f32 %v1006, %v1301
        %v1303 = vpop.f32.mrb[0].mxu0
        %1304 = vmatprep.mubr.f32.mxu0 0.0
        %1305 = vmatmul.mubr.f32.gmra.mrb[0].mxu0 %v1031
        %v1306 = vpop.f32.mrb[0].mxu0
        %v1307 = vadd.f32 %v1006, %v1306
        %v1308 = vpop.f32.mrb[0].mxu0
        %1309 = vmatprep.mubr.f32.mxu0 0.0
        %1310 = vmatmul.mubr.f32.gmra.mrb[0].mxu0 %v1034
        %v1311 = vpop.f32.mrb[0].mxu0
        %v1312 = vadd.f32 %v1006, %v1311
        %v1313 = vpop.f32.mrb[0].mxu0
        %1314 = vmatprep.mubr.f32.mxu0 0.0
        %1315 = vmatmul.mubr.f32.gmra.mrb[0].mxu0 %v1037
        %v1316 = vpop.f32.mrb[0].mxu0
        %v1317 = vadd.f32 %v1006, %v1316
        %v1318 = vpop.f32.mrb[0].mxu0
        %1319 = vmatprep.mubr.f32.mxu0 0.0
        %1320 = vmatmul.mubr.f32.gmra.mrb[0].mxu0 %v1040
        %v1321 = vpop.f32.mrb[0].mxu0
        %v1322 = vadd.f32 %v1006, %v1321
        %v1323 = vpop.f32.mrb[0].mxu0
        %1324 = vmatprep.mubr.f32.mxu0 0.0
        %1325 = vmatmul.mubr.f32.gmra.mrb[0].mxu0 %v1043
        %v1326 = vpop.f32.mrb[0].mxu0
        %v1327 = vadd.f32 %v1006, %v1326
        %v1328 = vpop.f32.mrb[0].mxu0
        %1329 = vmatprep.mubr.f32.mxu0 0.0
        %1330 = vmatmul.mubr.f32.gmra.mrb[0].mxu0 %v1046
        %v1331 = vpop.f32.mrb[0].mxu0
        %v1332 = vadd.f32 %v1006, %v1331
        %v1333 = vpop.f32.mrb[0].mxu0
        %1334 = vmatprep.mubr.f32.mxu0 0.0
        %1335 = vmatmul.mubr.f32.gmra.mrb[0].mxu0 %v1049
        %v1336 = vpop.f32.mrb[0].mxu0
        %v1337 = vadd.f32 %v1006, %v1336
        %v1338 = vpop.f32.mrb[0].mxu0
        %1339 = vmatprep.mubr.f32.mxu0 0.0
        %1340 = vmatmul.mubr.f32.gmra.mrb[0].mxu0 %v1052
        %v1341 = vpop.f32.mrb[0].mxu0
        %v1342 = vadd.f32 %v1006, %v1341
        %v1343 = vpop.f32.mrb[0].mxu0
        %1344 = vmatprep.mubr.f32.mxu0 0.0
        %1345 = vmatmul.mubr.f32.gmra.mrb[0].mxu0 %v1055
        %v1346 = vpop.f32.mrb[0].mxu0
        %v1347 = vadd.f32 %v1006, %v1346
        %v1348 = vpop.f32.mrb[0].mxu0
        %1349 = vmatprep.mubr.f32.mxu0 0.0
        %1350 = vmatmul.mubr.f32.gmra.mrb[0].mxu0 %v1058
        %v1351 = vpop.f32.mrb[0].mxu0
        %v1352 = vadd.f32 %v1006, %v1351
        %v1353 = vpop.f32.mrb[0].mxu0
        %1354 = vmatprep.mubr.f32.mxu0 0.0
        %1355 = vmatmul.mubr.f32.gmra.mrb[0].mxu0 %v1061
        %v1356 = vpop.f32.mrb[0].mxu0
        %v1357 = vadd.f32 %v1006, %v1356
        %v1358 = vpop.f32.mrb[0].mxu0
        %1359 = vmatprep.mubr.f32.mxu0 0.0
        %1360 = vmatmul.mubr.f32.gmra.mrb[0].mxu0 %v1064
        %v1361 = vpop.f32.mrb[0].mxu0
        %v1362 = vadd.f32 %v1006, %v1361
        %v1363 = vpop.f32.mrb[0].mxu0
        %1364 = vmatprep.mubr.f32.mxu0 0.0
        %1365 = vmatmul.mubr.f32.gmra.mrb[0].mxu0 %v1067
        %v1366 = vpop.f32.mrb[0].mxu0
        %v1367 = vadd.f32 %v1006, %v1366
        %v1368 = vpop.f32.mrb[0].mxu0
        %1369 = vmatprep.mubr.f32.mxu0 0.0
        %1370 = vmatmul.mubr.f32.gmra.mrb[0].mxu0 %v1070
        %v1371 = vpop.f32.mrb[0].mxu0
        %v1372 = vadd.f32 %v1006, %v1371
        %v1373 = vpop.f32.mrb[0].mxu0
        %1374 = vmatprep.mubr.f32.mxu0 0.0
        %1375 = vmatmul.mubr.f32.gmra.mrb[0].mxu0 %v1073
        %v1376 = vpop.f32.mrb[0].mxu0
        %v1377 = vadd.f32 %v1006, %v1376
        %v1378 = vpop.f32.mrb[0].mxu0
        %1379 = vmatprep.mubr.f32.mxu0 0.0
        %1380 = vmatmul.mubr.f32.gmra.mrb[0].mxu0 %v1076
        %v1381 = vpop.f32.mrb[0].mxu0
        %v1382 = vadd.f32 %v1006, %v1381
        %v1383 = vpop.f32.mrb[0].mxu0
        %1384 = vmatprep.mubr.f32.mxu0 0.0
        %1385 = vmatmul.mubr.f32.gmra.mrb[0].mxu0 %v1079
        %v1386 = vpop.f32.mrb[0].mxu0
        %v1387 = vadd.f32 %v1006, %v1386
        %v1388 = vpop.f32.mrb[0].mxu0
        %1389 = vmatprep.mubr.f32.mxu0 0.0
        %1390 = vmatmul.mubr.f32.gmra.mrb[0].mxu0 %v1082
        %v1391 = vpop.f32.mrb[0].mxu0
        %v1392 = vadd.f32 %v1006, %v1391
        %v1393 = vpop.f32.mrb[0].mxu0
        %1394 = vmatprep.mubr.f32.mxu0 0.0
        %1395 = vmatmul.mubr.f32.gmra.mrb[0].mxu0 %v1085
        %v1396 = vpop.f32.mrb[0].mxu0
        %v1397 = vadd.f32 %v1006, %v1396
        %v1398 = vpop.f32.mrb[0].mxu0
        %1399 = vmatprep.mubr.f32.mxu0 0.0
        %1400 = vmatmul.mubr.f32.gmra.mrb[0].mxu0 %v1088
        %v1401 = vpop.f32.mrb[0].mxu0
        %v1402 = vadd.f32 %v1006, %v1401
        %v1403 = vpop.f32.mrb[0].mxu0
        %1404 = vmatprep.mubr.f32.mxu0 0.0
        %1405 = vmatmul.mubr.f32.gmra.mrb[0].mxu0 %v1091
        %v1406 = vpop.f32.mrb[0].mxu0
        %v1407 = vadd.f32 %v1006, %v1406
        %v1408 = vpop.f32.mrb[0].mxu0
        %1409 = vmatprep.mubr.f32.mxu0 0.0
        %1410 = vmatmul.mubr.f32.gmra.mrb[0].mxu0 %v1094
        %v1411 = vpop.f32.mrb[0].mxu0
        %v1412 = vadd.f32 %v1006, %v1411
        %v1413 = vpop.f32.mrb[0].mxu0
        %1414 = vmatprep.mubr.f32.mxu0 0.0
        %1415 = vmatmul.mubr.f32.gmra.mrb[0].mxu0 %v1097
        %v1416 = vpop.f32.mrb[0].mxu0
        %v1417 = vadd.f32 %v1006, %v1416
        %v1418 = vpop.f32.mrb[0].mxu0
        %1419 = vmatprep.mubr.f32.mxu0 0.0
        %1420 = vmatmul.mubr.f32.gmra.mrb[0].mxu0 %v1100
        %v1421 = vpop.f32.mrb[0].mxu0
        %v1422 = vadd.f32 %v1006, %v1421
        %v1423 = vpop.f32.mrb[0].mxu0
        %1424 = vmatprep.mubr.f32.mxu0 0.0
        %1425 = vmatmul.mubr.f32.gmra.mrb[0].mxu0 %v1103
        %v1426 = vpop.f32.mrb[0].mxu0
        %v1427 = vadd.f32 %v1006, %v1426
        %v1428 = vpop.f32.mrb[0].mxu0
        %1429 = vmatprep.mubr.f32.mxu0 0.0
        %1430 = vmatmul.mubr.f32.gmra.mrb[0].mxu0 %v1106
        %v1431 = vpop.f32.mrb[0].mxu0
        %v1432 = vadd.f32 %v1006, %v1431
        %v1433 = vpop.f32.mrb[0].mxu0
        %1434 = vmatprep.mubr.f32.mxu0 0.0
        %1435 = vmatmul.mubr.f32.gmra.mrb[0].mxu0 %v1109
        %v1436 = vpop.f32.mrb[0].mxu0
        %v1437 = vadd.f32 %v1006, %v1436
        %v1438 = vpop.f32.mrb[0].mxu0
        %1439 = vmatprep.mubr.f32.mxu0 0.0
        %1440 = vmatmul.mubr.f32.gmra.mrb[0].mxu0 %v1112
        %v1441 = vpop.f32.mrb[0].mxu0
        %v1442 = vadd.f32 %v1006, %v1441
        %v1443 = vpop.f32.mrb[0].mxu0
        %1444 = vmatprep.mubr.f32.mxu0 0.0
        %1445 = vmatmul.mubr.f32.gmra.mrb[0].mxu0 %v1115
        %v1446 = vpop.f32.mrb[0].mxu0
        %v1447 = vadd.f32 %v1006, %v1446
        %v1448 = vpop.f32.mrb[0].mxu0
        %1449 = vmatprep.mubr.f32.mxu0 0.0
        %1450 = vmatmul.mubr.f32.gmra.mrb[0].mxu0 %v1118
        %v1451 = vpop.f32.mrb[0].mxu0
        %v1452 = vadd.f32 %v1006, %v1451
        %v1453 = vpop.f32.mrb[0].mxu0
        %1454 = vmatprep.mubr.f32.mxu0 0.0
        %1455 = vmatmul.mubr.f32.gmra.mrb[0].mxu0 %v1121
        %v1456 = vpop.f32.mrb[0].mxu0
        %v1457 = vadd.f32 %v1006, %v1456
        %v1458 = vpop.f32.mrb[0].mxu0
        %1459 = vmatprep.mubr.f32.mxu0 0.0
        %1460 = vmatmul.mubr.f32.gmra.mrb[0].mxu0 %v1124
        %v1461 = vpop.f32.mrb[0].mxu0
        %v1462 = vadd.f32 %v1006, %v1461
        %v1463 = vpop.f32.mrb[0].mxu0
        %1464 = vmatprep.mubr.f32.mxu0 0.0
        %1465 = vmatmul.mubr.f32.gmra.mrb[0].mxu0 %v1127
        %v1466 = vpop.f32.mrb[0].mxu0
        %v1467 = vadd.f32 %v1006, %v1466
        %v1468 = vpop.f32.mrb[0].mxu0
        %1469 = vmatprep.mubr.f32.mxu0 0.0
        %1470 = vmatmul.mubr.f32.gmra.mrb[0].mxu0 %v1130
        %v1471 = vpop.f32.mrb[0].mxu0
        %v1472 = vadd.f32 %v1006, %v1471
        %v1473 = vpop.f32.mrb[0].mxu0
        %1474 = vmatprep.mubr.f32.mxu0 0.0
        %1475 = vmatmul.mubr.f32.gmra.mrb[0].mxu0 %v1133
        %v1476 = vpop.f32.mrb[0].mxu0
        %v1477 = vadd.f32 %v1006, %v1476
        %v1478 = vpop.f32.mrb[0].mxu0
        %1479 = vmatprep.mubr.f32.mxu0 0.0
        %1480 = vmatmul.mubr.f32.gmra.mrb[0].mxu0 %v1136
        %v1481 = vpop.f32.mrb[0].mxu0
        %v1482 = vadd.f32 %v1006, %v1481
        %v1483 = vpop.f32.mrb[0].mxu0
        %1484 = vmatprep.mubr.f32.mxu0 0.0
        %1485 = vmatmul.mubr.f32.gmra.mrb[0].mxu0 %v1139
        %v1486 = vpop.f32.mrb[0].mxu0
        %v1487 = vadd.f32 %v1006, %v1486
        %v1488 = vpop.f32.mrb[0].mxu0
        %1489 = vmatprep.mubr.f32.mxu0 0.0
        %1490 = vmatmul.mubr.f32.gmra.mrb[0].mxu0 %v1142
        %v1491 = vpop.f32.mrb[0].mxu0
        %v1492 = vadd.f32 %v1006, %v1491
        %v1493 = vpop.f32.mrb[0].mxu0
        %1494 = vmatprep.mubr.f32.mxu0 0.0
        %1495 = vmatmul.mubr.f32.gmra.mrb[0].mxu0 %v1145
        %v1496 = vpop.f32.mrb[0].mxu0
        %v1497 = vadd.f32 %v1006, %v1496
        %v1498 = vpop.f32.mrb[0].mxu0
        %1499 = vmatprep.mubr.f32.mxu0 0.0
        %1500 = vmatmul.mubr.f32.gmra.mrb[0].mxu0 %v1148
        %v1501 = vpop.f32.mrb[0].mxu0
        %v1502 = vadd.f32 %v1006, %v1501
        %v1503 = vpop.f32.mrb[0].mxu0
        %1504 = vmatprep.mubr.f32.mxu0 0.0
        %1505 = vmatmul.mubr.f32.gmra.mrb[0].mxu0 %v1151
        %v1506 = vpop.f32.mrb[0].mxu0
        %v1507 = vadd.f32 %v1006, %v1506
        %v1508 = vpop.f32.mrb[0].mxu0
        %1509 = vmatprep.mubr.f32.mxu0 0.0
        %1510 = vmatmul.mubr.f32.gmra.mrb[0].mxu0 %v1154
        %v1511 = vpop.f32.mrb[0].mxu0
        %v1512 = vadd.f32 %v1006, %v1511
        %v1513 = vpop.f32.mrb[0].mxu0
        %1514 = vmatprep.mubr.f32.mxu0 0.0
        %1515 = vmatmul.mubr.f32.gmra.mrb[0].mxu0 %v1157
        %v1516 = vpop.f32.mrb[0].mxu0
        %v1517 = vadd.f32 %v1006, %v1516
        %v1518 = vpop.f32.mrb[0].mxu0
        %1519 = vmatprep.mubr.f32.mxu0 0.0
        %1520 = vmatmul.mubr.f32.gmra.mrb[0].mxu0 %v1160
        %v1521 = vpop.f32.mrb[0].mxu0
        %v1522 = vadd.f32 %v1006, %v1521
        %v1523 = vpop.f32.mrb[0].mxu0
        %1524 = vmatprep.mubr.f32.mxu0 0.0
        %1525 = vmatmul.mubr.f32.gmra.mrb[0].mxu0 %v1163
        %v1526 = vpop.f32.mrb[0].mxu0
        %v1527 = vadd.f32 %v1006, %v1526
        %v1528 = vpop.f32.mrb[0].mxu0
        %1529 = vmatprep.mubr.f32.mxu0 0.0
        %1530 = vmatmul.mubr.f32.gmra.mrb[0].mxu0 %v1166
        %v1531 = vpop.f32.mrb[0].mxu0
        %v1532 = vadd.f32 %v1006, %v1531
        %v1533 = vpop.f32.mrb[0].mxu0
        %1534 = vmatprep.mubr.f32.mxu0 0.0
        %1535 = vmatmul.mubr.f32.gmra.mrb[0].mxu0 %v1169
        %v1536 = vpop.f32.mrb[0].mxu0
        %v1537 = vadd.f32 %v1006, %v1536
        %v1538 = vpop.f32.mrb[0].mxu0
        %1539 = vmatprep.mubr.f32.mxu0 0.0
        %1540 = vmatmul.mubr.f32.gmra.mrb[0].mxu0 %v1172
        %v1541 = vpop.f32.mrb[0].mxu0
        %v1542 = vadd.f32 %v1006, %v1541
        %v1543 = vpop.f32.mrb[0].mxu0
        %1544 = vmatprep.mubr.f32.mxu0 0.0
        %1545 = vmatmul.mubr.f32.gmra.mrb[0].mxu0 %v1175
        %v1546 = vpop.f32.mrb[0].mxu0
        %v1547 = vadd.f32 %v1006, %v1546
        %v1548 = vpop.f32.mrb[0].mxu0
        %1549 = vmatprep.mubr.f32.mxu0 0.0
        %1550 = vmatmul.mubr.f32.gmra.mrb[0].mxu0 %v1178
        %v1551 = vpop.f32.mrb[0].mxu0
        %v1552 = vadd.f32 %v1006, %v1551
        %v1553 = vpop.f32.mrb[0].mxu0
        %1554 = vmatprep.mubr.f32.mxu0 0.0
        %1555 = vmatmul.mubr.f32.gmra.mrb[0].mxu0 %v1181
        %v1556 = vpop.f32.mrb[0].mxu0
        %v1557 = vadd.f32 %v1006, %v1556
        %v1558 = vpop.f32.mrb[0].mxu0
        %1559 = vmatprep.mubr.f32.mxu0 0.0
        %1560 = vmatmul.mubr.f32.gmra.mrb[0].mxu0 %v1184
        %v1561 = vpop.f32.mrb[0].mxu0
        %v1562 = vadd.f32 %v1006, %v1561
        %v1563 = vpop.f32.mrb[0].mxu0
        %1564 = vmatprep.mubr.f32.mxu0 0.0
        %1565 = vmatmul.mubr.f32.gmra.mrb[0].mxu0 %v1187
        %v1566 = vpop.f32.mrb[0].mxu0
        %v1567 = vadd.f32 %v1006, %v1566
        %v1568 = vpop.f32.mrb[0].mxu0
        %1569 = vmatprep.mubr.f32.mxu0 0.0
        %1570 = vmatmul.mubr.f32.gmra.mrb[0].mxu0 %v1190
        %v1571 = vpop.f32.mrb[0].mxu0
        %v1572 = vadd.f32 %v1006, %v1571
        %v1573 = vpop.f32.mrb[0].mxu0
        %1574 = vmatprep.mubr.f32.mxu0 0.0
        %1575 = vmatmul.mubr.f32.gmra.mrb[0].mxu0 %v1193
        %v1576 = vpop.f32.mrb[0].mxu0
        %v1577 = vadd.f32 %v1006, %v1576
        %v1578 = vpop.f32.mrb[0].mxu0
        %1579 = vmatprep.mubr.f32.mxu0 0.0
        %1580 = vmatmul.mubr.f32.gmra.mrb[0].mxu0 %v1196
        %v1581 = vpop.f32.mrb[0].mxu0
        %v1582 = vadd.f32 %v1006, %v1581
        %v1583 = vpop.f32.mrb[0].mxu0
        %1584 = vmatprep.mubr.f32.mxu0 0.0
        %1585 = vmatmul.mubr.f32.gmra.mrb[0].mxu0 %v1199
        %v1586 = vpop.f32.mrb[0].mxu0
        %v1587 = vadd.f32 %v1006, %v1586
        %v1588 = vpop.f32.mrb[0].mxu0
        %1589 = vdwg.mxu0
        %v1590 = vmax.f32 %v1272, 0.0
        %v1591 = vmax.f32 %v1277, 0.0
        %v1592 = vmax.f32 %v1282, 0.0
        %v1593 = vmax.f32 %v1287, 0.0
        %v1594 = vmax.f32 %v1292, 0.0
        %v1595 = vmax.f32 %v1297, 0.0
        %v1596 = vmax.f32 %v1302, 0.0
        %v1597 = vmax.f32 %v1307, 0.0
        %v1598 = vmax.f32 %v1312, 0.0
        %v1599 = vmax.f32 %v1317, 0.0
        %v1600 = vmax.f32 %v1322, 0.0
        %v1601 = vmax.f32 %v1327, 0.0
        %v1602 = vmax.f32 %v1332, 0.0
        %v1603 = vmax.f32 %v1337, 0.0
        %v1604 = vmax.f32 %v1342, 0.0
        %v1605 = vmax.f32 %v1347, 0.0
        %v1606 = vmax.f32 %v1352, 0.0
        %v1607 = vmax.f32 %v1357, 0.0
        %v1608 = vmax.f32 %v1362, 0.0
        %v1609 = vmax.f32 %v1367, 0.0
        %v1610 = vmax.f32 %v1372, 0.0
        %v1611 = vmax.f32 %v1377, 0.0
        %v1612 = vmax.f32 %v1382, 0.0
        %v1613 = vmax.f32 %v1387, 0.0
        %v1614 = vmax.f32 %v1392, 0.0
        %v1615 = vmax.f32 %v1397, 0.0
        %v1616 = vmax.f32 %v1402, 0.0
        %v1617 = vmax.f32 %v1407, 0.0
        %v1618 = vmax.f32 %v1412, 0.0
        %v1619 = vmax.f32 %v1417, 0.0
        %v1620 = vmax.f32 %v1422, 0.0
        %v1621 = vmax.f32 %v1427, 0.0
        %v1622 = vmax.f32 %v1432, 0.0
        %v1623 = vmax.f32 %v1437, 0.0
        %v1624 = vmax.f32 %v1442, 0.0
        %v1625 = vmax.f32 %v1447, 0.0
        %v1626 = vmax.f32 %v1452, 0.0
        %v1627 = vmax.f32 %v1457, 0.0
        %v1628 = vmax.f32 %v1462, 0.0
        %v1629 = vmax.f32 %v1467, 0.0
        %v1630 = vmax.f32 %v1472, 0.0
        %v1631 = vmax.f32 %v1477, 0.0
        %v1632 = vmax.f32 %v1482, 0.0
        %v1633 = vmax.f32 %v1487, 0.0
        %v1634 = vmax.f32 %v1492, 0.0
        %v1635 = vmax.f32 %v1497, 0.0
        %v1636 = vmax.f32 %v1502, 0.0
        %v1637 = vmax.f32 %v1507, 0.0
        %v1638 = vmax.f32 %v1512, 0.0
        %v1639 = vmax.f32 %v1517, 0.0
        %v1640 = vmax.f32 %v1522, 0.0
        %v1641 = vmax.f32 %v1527, 0.0
        %v1642 = vmax.f32 %v1532, 0.0
        %v1643 = vmax.f32 %v1537, 0.0
        %v1644 = vmax.f32 %v1542, 0.0
        %v1645 = vmax.f32 %v1547, 0.0
        %v1646 = vmax.f32 %v1552, 0.0
        %v1647 = vmax.f32 %v1557, 0.0
        %v1648 = vmax.f32 %v1562, 0.0
        %v1649 = vmax.f32 %v1567, 0.0
        %v1650 = vmax.f32 %v1572, 0.0
        %v1651 = vmax.f32 %v1577, 0.0
        %v1652 = vmax.f32 %v1582, 0.0
        %v1653 = vmax.f32 %v1587, 0.0
        %v1654 = vld [vmem:[%s5] sm:$0x1]
        %v1655 = vld [vmem:[#allocation2] sm:$0x1]
        %1657 = vset.pattern.permute.xlu0 0
        %1658 = vperm.xlu0 %1657, %v1655
        %v1659 = vpop.permute.xlu0 %1658
        %v1661 = vlaneseq
        %v1662 = vshrl.u32 %v1661, 7
        %v1663 = vsub.s32 0, %v1662
        %v1664 = vrot.slane %v1659, %v1663
        %vm1665 = vcmask 64512
        %v1667 = vsel %vm1665, %v1654, 0
        %v1670 = vsel %vm1665, %v1590, 0
        %v1673 = vsel %vm1665, %v1591, 0
        %v1676 = vsel %vm1665, %v1592, 0
        %v1679 = vsel %vm1665, %v1593, 0
        %v1682 = vsel %vm1665, %v1594, 0
        %v1685 = vsel %vm1665, %v1595, 0
        %v1688 = vsel %vm1665, %v1596, 0
        %v1691 = vsel %vm1665, %v1597, 0
        %v1694 = vsel %vm1665, %v1598, 0
        %v1697 = vsel %vm1665, %v1599, 0
        %v1700 = vsel %vm1665, %v1600, 0
        %v1703 = vsel %vm1665, %v1601, 0
        %v1706 = vsel %vm1665, %v1602, 0
        %v1709 = vsel %vm1665, %v1603, 0
        %v1712 = vsel %vm1665, %v1604, 0
        %v1715 = vsel %vm1665, %v1605, 0
        %v1718 = vsel %vm1665, %v1606, 0
        %v1721 = vsel %vm1665, %v1607, 0
        %v1724 = vsel %vm1665, %v1608, 0
        %v1727 = vsel %vm1665, %v1609, 0
        %v1730 = vsel %vm1665, %v1610, 0
        %v1733 = vsel %vm1665, %v1611, 0
        %v1736 = vsel %vm1665, %v1612, 0
        %v1739 = vsel %vm1665, %v1613, 0
        %v1742 = vsel %vm1665, %v1614, 0
        %v1745 = vsel %vm1665, %v1615, 0
        %v1748 = vsel %vm1665, %v1616, 0
        %v1751 = vsel %vm1665, %v1617, 0
        %v1754 = vsel %vm1665, %v1618, 0
        %v1757 = vsel %vm1665, %v1619, 0
        %v1760 = vsel %vm1665, %v1620, 0
        %v1763 = vsel %vm1665, %v1621, 0
        %v1766 = vsel %vm1665, %v1622, 0
        %v1769 = vsel %vm1665, %v1623, 0
        %v1772 = vsel %vm1665, %v1624, 0
        %v1775 = vsel %vm1665, %v1625, 0
        %v1778 = vsel %vm1665, %v1626, 0
        %v1781 = vsel %vm1665, %v1627, 0
        %v1784 = vsel %vm1665, %v1628, 0
        %v1787 = vsel %vm1665, %v1629, 0
        %v1790 = vsel %vm1665, %v1630, 0
        %v1793 = vsel %vm1665, %v1631, 0
        %v1796 = vsel %vm1665, %v1632, 0
        %v1799 = vsel %vm1665, %v1633, 0
        %v1802 = vsel %vm1665, %v1634, 0
        %v1805 = vsel %vm1665, %v1635, 0
        %v1808 = vsel %vm1665, %v1636, 0
        %v1811 = vsel %vm1665, %v1637, 0
        %v1814 = vsel %vm1665, %v1638, 0
        %v1817 = vsel %vm1665, %v1639, 0
        %v1820 = vsel %vm1665, %v1640, 0
        %v1823 = vsel %vm1665, %v1641, 0
        %v1826 = vsel %vm1665, %v1642, 0
        %v1829 = vsel %vm1665, %v1643, 0
        %v1832 = vsel %vm1665, %v1644, 0
        %v1835 = vsel %vm1665, %v1645, 0
        %v1838 = vsel %vm1665, %v1646, 0
        %v1841 = vsel %vm1665, %v1647, 0
        %v1844 = vsel %vm1665, %v1648, 0
        %v1847 = vsel %vm1665, %v1649, 0
        %v1850 = vsel %vm1665, %v1650, 0
        %v1853 = vsel %vm1665, %v1651, 0
        %v1856 = vsel %vm1665, %v1652, 0
        %v1859 = vsel %vm1665, %v1653, 0
        %1861 = vmatprep.subr.mxu0 0.0
        %1862 = vmatpush1.xpose.msra.mxu0 %v1670
        %1863 = vmatprep.subr.mxu0 0.0
        %1864 = vmatpush1.xpose.msra.mxu0 %v1673
        %1865 = vmatprep.subr.mxu0 0.0
        %1866 = vmatpush1.xpose.msra.mxu0 %v1676
        %1867 = vmatprep.subr.mxu0 0.0
        %1868 = vmatpush1.xpose.msra.mxu0 %v1679
        %1869 = vmatprep.subr.mxu0 0.0
        %1870 = vmatpush1.xpose.msra.mxu0 %v1682
        %1871 = vmatprep.subr.mxu0 0.0
        %1872 = vmatpush1.xpose.msra.mxu0 %v1685
        %1873 = vmatprep.subr.mxu0 0.0
        %1874 = vmatpush1.xpose.msra.mxu0 %v1688
        %1875 = vmatprep.subr.mxu0 0.0
        %1876 = vmatpush1.xpose.msra.mxu0 %v1691
        %1877 = vmatprep.subr.mxu0 0.0
        %1878 = vmatpush1.xpose.msra.mxu0 %v1694
        %1879 = vmatprep.subr.mxu0 0.0
        %1880 = vmatpush1.xpose.msra.mxu0 %v1697
        %1881 = vmatprep.subr.mxu0 0.0
        %1882 = vmatpush1.xpose.msra.mxu0 %v1700
        %1883 = vmatprep.subr.mxu0 0.0
        %1884 = vmatpush1.xpose.msra.mxu0 %v1703
        %1885 = vmatprep.subr.mxu0 0.0
        %1886 = vmatpush1.xpose.msra.mxu0 %v1706
        %1887 = vmatprep.subr.mxu0 0.0
        %1888 = vmatpush1.xpose.msra.mxu0 %v1709
        %1889 = vmatprep.subr.mxu0 0.0
        %1890 = vmatpush1.xpose.msra.mxu0 %v1712
        %1891 = vmatprep.subr.mxu0 0.0
        %1892 = vmatpush1.xpose.msra.mxu0 %v1715
        %1893 = vmatprep.subr.mxu0 0.0
        %1894 = vmatpush1.xpose.msra.mxu0 %v1718
        %1895 = vmatprep.subr.mxu0 0.0
        %1896 = vmatpush1.xpose.msra.mxu0 %v1721
        %1897 = vmatprep.subr.mxu0 0.0
        %1898 = vmatpush1.xpose.msra.mxu0 %v1724
        %1899 = vmatprep.subr.mxu0 0.0
        %1900 = vmatpush1.xpose.msra.mxu0 %v1727
        %1901 = vmatprep.subr.mxu0 0.0
        %1902 = vmatpush1.xpose.msra.mxu0 %v1730
        %1903 = vmatprep.subr.mxu0 0.0
        %1904 = vmatpush1.xpose.msra.mxu0 %v1733
        %1905 = vmatprep.subr.mxu0 0.0
        %1906 = vmatpush1.xpose.msra.mxu0 %v1736
        %1907 = vmatprep.subr.mxu0 0.0
        %1908 = vmatpush1.xpose.msra.mxu0 %v1739
        %1909 = vmatprep.subr.mxu0 0.0
        %1910 = vmatpush1.xpose.msra.mxu0 %v1742
        %1911 = vmatprep.subr.mxu0 0.0
        %1912 = vmatpush1.xpose.msra.mxu0 %v1745
        %1913 = vmatprep.subr.mxu0 0.0
        %1914 = vmatpush1.xpose.msra.mxu0 %v1748
        %1915 = vmatprep.subr.mxu0 0.0
        %1916 = vmatpush1.xpose.msra.mxu0 %v1751
        %1917 = vmatprep.subr.mxu0 0.0
        %1918 = vmatpush1.xpose.msra.mxu0 %v1754
        %1919 = vmatprep.subr.mxu0 0.0
        %1920 = vmatpush1.xpose.msra.mxu0 %v1757
        %1921 = vmatprep.subr.mxu0 0.0
        %1922 = vmatpush1.xpose.msra.mxu0 %v1760
        %1923 = vmatprep.subr.mxu0 0.0
        %1924 = vmatpush1.xpose.msra.mxu0 %v1763
        %1925 = vmatprep.mubr.f32.mxu0 0.0
        %1926 = vmatmul.mubr.f32.gmra.mrb[0].mxu0 %v1667
        %v1927 = vpop.f32.mrb[0].mxu0
        %v1928 = vadd.f32 %v1664, %v1927
        %v1929 = vpop.f32.mrb[0].mxu0
        %v1930 = vadd.f32 %v1664, %v1929
        %1931 = vdwg.mxu0
        %1932 = vmatprep.subr.mxu0 0.0
        %1933 = vmatpush1.xpose.msra.mxu0 %v1766
        %1934 = vmatprep.subr.mxu0 0.0
        %1935 = vmatpush1.xpose.msra.mxu0 %v1769
        %1936 = vmatprep.subr.mxu0 0.0
        %1937 = vmatpush1.xpose.msra.mxu0 %v1772
        %1938 = vmatprep.subr.mxu0 0.0
        %1939 = vmatpush1.xpose.msra.mxu0 %v1775
        %1940 = vmatprep.subr.mxu0 0.0
        %1941 = vmatpush1.xpose.msra.mxu0 %v1778
        %1942 = vmatprep.subr.mxu0 0.0
        %1943 = vmatpush1.xpose.msra.mxu0 %v1781
        %1944 = vmatprep.subr.mxu0 0.0
        %1945 = vmatpush1.xpose.msra.mxu0 %v1784
        %1946 = vmatprep.subr.mxu0 0.0
        %1947 = vmatpush1.xpose.msra.mxu0 %v1787
        %1948 = vmatprep.subr.mxu0 0.0
        %1949 = vmatpush1.xpose.msra.mxu0 %v1790
        %1950 = vmatprep.subr.mxu0 0.0
        %1951 = vmatpush1.xpose.msra.mxu0 %v1793
        %1952 = vmatprep.subr.mxu0 0.0
        %1953 = vmatpush1.xpose.msra.mxu0 %v1796
        %1954 = vmatprep.subr.mxu0 0.0
        %1955 = vmatpush1.xpose.msra.mxu0 %v1799
        %1956 = vmatprep.subr.mxu0 0.0
        %1957 = vmatpush1.xpose.msra.mxu0 %v1802
        %1958 = vmatprep.subr.mxu0 0.0
        %1959 = vmatpush1.xpose.msra.mxu0 %v1805
        %1960 = vmatprep.subr.mxu0 0.0
        %1961 = vmatpush1.xpose.msra.mxu0 %v1808
        %1962 = vmatprep.subr.mxu0 0.0
        %1963 = vmatpush1.xpose.msra.mxu0 %v1811
        %1964 = vmatprep.subr.mxu0 0.0
        %1965 = vmatpush1.xpose.msra.mxu0 %v1814
        %1966 = vmatprep.subr.mxu0 0.0
        %1967 = vmatpush1.xpose.msra.mxu0 %v1817
        %1968 = vmatprep.subr.mxu0 0.0
        %1969 = vmatpush1.xpose.msra.mxu0 %v1820
        %1970 = vmatprep.subr.mxu0 0.0
        %1971 = vmatpush1.xpose.msra.mxu0 %v1823
        %1972 = vmatprep.subr.mxu0 0.0
        %1973 = vmatpush1.xpose.msra.mxu0 %v1826
        %1974 = vmatprep.subr.mxu0 0.0
        %1975 = vmatpush1.xpose.msra.mxu0 %v1829
        %1976 = vmatprep.subr.mxu0 0.0
        %1977 = vmatpush1.xpose.msra.mxu0 %v1832
        %1978 = vmatprep.subr.mxu0 0.0
        %1979 = vmatpush1.xpose.msra.mxu0 %v1835
        %1980 = vmatprep.subr.mxu0 0.0
        %1981 = vmatpush1.xpose.msra.mxu0 %v1838
        %1982 = vmatprep.subr.mxu0 0.0
        %1983 = vmatpush1.xpose.msra.mxu0 %v1841
        %1984 = vmatprep.subr.mxu0 0.0
        %1985 = vmatpush1.xpose.msra.mxu0 %v1844
        %1986 = vmatprep.subr.mxu0 0.0
        %1987 = vmatpush1.xpose.msra.mxu0 %v1847
        %1988 = vmatprep.subr.mxu0 0.0
        %1989 = vmatpush1.xpose.msra.mxu0 %v1850
        %1990 = vmatprep.subr.mxu0 0.0
        %1991 = vmatpush1.xpose.msra.mxu0 %v1853
        %1992 = vmatprep.subr.mxu0 0.0
        %1993 = vmatpush1.xpose.msra.mxu0 %v1856
        %1994 = vmatprep.subr.mxu0 0.0
        %1995 = vmatpush1.xpose.msra.mxu0 %v1859
        %1996 = vmatprep.mubr.f32.mxu0 0.0
        %1997 = vmatmul.mubr.f32.gmra.mrb[0].mxu0 %v1667
        %v1998 = vpop.f32.mrb[0].mxu0
        %v1999 = vadd.f32 %v1664, %v1998
        %v2000 = vpop.f32.mrb[0].mxu0
        %v2001 = vadd.f32 %v1664, %v2000
        %2002 = vdwg.mxu0
        %v2003 = vmul.f32 %v1928, 0.5
        %v2004 = vmul.f32 %v1930, 0.5
        %v2005 = vmul.f32 %v1999, 0.5
        %v2006 = vmul.f32 %v2001, 0.5
        %v2007 = vtanh.pop %v2003
        %v2008 = vtanh.pop %v2004
        %v2009 = vtanh.pop %v2005
        %v2010 = vtanh.pop %v2006
        %v2011 = vadd.f32 %v2007, 1.0
        %v2012 = vadd.f32 %v2008, 1.0
        %v2013 = vadd.f32 %v2009, 1.0
        %v2014 = vadd.f32 %v2010, 1.0
        %v2015 = vmul.f32 %v2011, 0.5
        %v2016 = vmul.f32 %v2012, 0.5
        %v2017 = vmul.f32 %v2013, 0.5
        %v2018 = vmul.f32 %v2014, 0.5
        %v2023 = vcombine.low %v2015, %v2016
        %v2024 = vcombine.low %v2017, %v2018
        %v2026 = vunpack.c.l.s4 1966171168
        %v2027 = vunpack.c.0.s8 %v2026
        %v2028 = vlaneseq
        %v2029 = vshrl.u32 %v2028, 7
        %v2030 = vsub.s32 %v2027, %v2029
        %v2031 = vrot.slane %v2023, %v2030
        %v2033 = vunpack.c.l.s4 1966171168
        %v2034 = vunpack.c.0.s8 %v2033
        %v2035 = vlaneseq
        %v2036 = vshrl.u32 %v2035, 7
        %v2037 = vsub.s32 %v2034, %v2036
        %v2038 = vrot.slane %v2024, %v2037
        %v2039 = vcombine.low %v2031, %v2038
        %v2041 = vunpack.c.l.s4 1966171168
        %v2042 = vunpack.c.0.s8 %v2041
        %v2043 = vlaneseq
        %v2044 = vshrl.u32 %v2043, 7
        %v2045 = vsub.s32 %v2042, %v2044
        %v2046 = vrot.slane %v2039, %v2045
        %v2048 = vlaneseq
        %vm2049 = vcmp.ge.s32.totalorder %v2048, 0
        %vm2050 = vcmp.lt.s32.totalorder %v2048, 512
        %vm2051 = vmand %vm2049, %vm2050
        %2052 = vst.msk [vmem:[%s274] sm:$0xf] %vm2051, %v2046
        %s2053 = sand.u32 %s183, 1
        %s2054 = scalar_lea.sflag [#allocation4], %s2053
        %s2055 = sand.u32 %s183, 1
        %s2056 = smul.addr %s2055, 4
        %s2057 = scalar_lea.vmem [#allocation3], %s2056
        // Predicated region
        $region49: #{tpu_custom_call.1} parent=47 // pred_check
          %p2058 = pneg %p193
        $region50: #{tpu_custom_call.1} parent=47 // pred_check_branch
          %2060 = sbr.rel (%p2058) target = $region52
        $region51: #{tpu_custom_call.1} parent=47 // pred_region
          %s2061 = smul.u32 4, %s23
          %s2063 = ssub.s32 64, 64
          %2064 = vsyncadd %s2054, %s2063
          %s2065 = smul.addr %s2061, 16
          %s2066 = scalar_lea.hbm %s7, %s2065
          %s2068 = sshll.u32 %s2057, 4
          %s2069 = int_to_ptr.vmem [resolvable:$true] %s2068
          %2071 = dma.vmem_to_hbm [thread:$0]  %s2069, 64, %s2066, %s2054
        $region52: #{tpu_custom_call.1} parent=47 // pred_fallthru
          _
      $region48: #{tpu_custom_call.1} parent=5 // pred_fallthru
        _
      %p2072 = scmp.le.s32.totalorder 2, %s18
      // Predicated region
      $region53: #{tpu_custom_call.1} parent=5 // pred_check
        %p2073 = pneg %p2072
      $region54: #{tpu_custom_call.1} parent=5 // pred_check_branch
        %2075 = sbr.rel (%p2073) target = $region56
      $region55: #{tpu_custom_call.1} parent=5 // pred_region
        %s2076 = ssub.s32 %s18, 2
        // Predicated region
        $region57: #{tpu_custom_call.1} parent=55 // pred_check
          %p2077 = pneg %p199
        $region58: #{tpu_custom_call.1} parent=55 // pred_check_branch
          %2079 = sbr.rel (%p2077) target = $region60
        $region59: #{tpu_custom_call.1} parent=55 // pred_region
          %s2080 = sand.u32 %s184, 1
          %s2081 = scalar_lea.sflag [#allocation4], %s2080
          %s2082 = sand.u32 %s184, 1
          %s2083 = smul.addr %s2082, 4
          %s2084 = scalar_lea.vmem [#allocation3], %s2083
          %2085 = dma.done %s2081, 64
        $region60: #{tpu_custom_call.1} parent=55 // pred_fallthru
          _
      $region56: #{tpu_custom_call.1} parent=5 // pred_fallthru
        _
    $region6: #{tpu_custom_call.1} parent=1 // loop_footer
      %s22 = sadd.s32 1, %s18
    $region7: #{tpu_custom_call.1} parent=1 // loop_footer_branch
      %17 = sbr.rel target = $region3
    $region8: #{tpu_custom_call.1} parent=1 // loop_exit
      _
    %2086 = vsyncpa [#allocation4], 1
    %s2087 = scalar_lea.sflag [#allocation4], 1
    %2088 = vsyncpa %s2087, 1

</llo_original>
